<compile_context>
chip_gen: v5e
topology: v5e:2x2
jax: 0.10.0
libtpu: 0.0.40
codegen_flags: <defaults>
</compile_context>

<pallas_src>
import functools

import jax
import jax.numpy as jnp
from jax.experimental import pallas as pl
from jax.experimental.pallas import tpu as pltpu

KERNEL_WINS = (3, 4, 5)   # kernel_height of the reference module
C_PAD = 128               # lane-dense fused channel block (all windows)
N_PAD = 128               # lane-dense logits block


def _round_up(x, m):
    return (x + m - 1) // m * m


def textcnn_kernel(ids_ref, table_ref, wflat_ref, maskb_ref, fcw_ref, fcb_ref,
                   out_ref, *, t_pool, l_pad, e_dim, k_max):
    """One batch tile: fused embed + conv (all windows) + masked max-pool + FC."""
    tb_l = ids_ref.shape[0]
    tb = tb_l // l_pad
    vocab_lanes = table_ref.shape[0]
    mxu_dtype = wflat_ref.dtype

    # --- Fused embedding lookup as a one-hot MXU matmul (table is VMEM
    #     resident; per-token HBM traffic is just the int32 id).
    lane_id = jax.lax.broadcasted_iota(jnp.int32, (tb_l, vocab_lanes), 1)
    onehot = (lane_id == ids_ref[...]).astype(mxu_dtype)        # (tb*l_pad, V)
    emb = jnp.dot(onehot, table_ref[...],
                  preferred_element_type=jnp.float32)           # (tb*l_pad, E)
    emb = emb.astype(mxu_dtype).reshape(tb, l_pad, e_dim)

    # --- im2col over the k_max taps: the shift is applied to the 32-lane x
    #     operand (cheap) instead of the 128+-lane conv output; then a single
    #     conv matmul with contraction K = k_max*E and N = 128 lanes.
    x_col = jnp.concatenate([emb[:, i:i + t_pool, :] for i in range(k_max)],
                            axis=-1)                            # (tb, t_pool, k_max*E)
    y = jnp.dot(x_col.reshape(tb * t_pool, k_max * e_dim), wflat_ref[...],
                preferred_element_type=jnp.float32)
    y = y.reshape(tb, t_pool, wflat_ref.shape[1])               # (tb, t_pool, 128)

    # --- masked global max-pool over the sequence axis; the per-channel conv
    #     bias is pre-folded into maskb (valid: +bias, invalid: -1e30).  Valid
    #     only because this forward has no ReLU.
    pooled = jnp.max(y + maskb_ref[...], axis=1)                # (tb, 128) f32

    # --- FC.  Padded pooled lanes >= n_win*C are neutralized because the
    #     corresponding fcw rows are built as exact zeros in the wrapper.
    logits = jnp.dot(pooled.astype(mxu_dtype), fcw_ref[...],
                     preferred_element_type=jnp.float32) + fcb_ref[...]
    out_ref[...] = logits.astype(out_ref.dtype)


def textcnn_forward(token_ids, embed_table, conv_ws, conv_bs, fc_w, fc_b,
                    num_class, *, batch_block=256, mxu_dtype=jnp.bfloat16):
    """token_ids: (B, L) int32.  embed_table: (vocab, E) f32.
       conv_ws[j]: (K_j, E, C).  conv_bs[j]: (1, C).
       fc_w: (n_win*C, num_class).  fc_b: (1, num_class)."""
    B, L = token_ids.shape
    vocab, E = embed_table.shape
    C = conv_ws[0].shape[-1]
    n_win = len(conv_ws)
    wins = [int(w.shape[0]) for w in conv_ws]
    k_min, k_max = min(wins), max(wins)
    assert n_win * C <= C_PAD and num_class <= N_PAD
    assert L >= k_max

    # Sublane-friendly padded extents.
    t_pool = _round_up(L - k_min + 1, 8)
    l_pad = _round_up(max(L, t_pool + k_max - 1), 8)
    # Keep the batch tile large (MXU M-fill, amortize grid-step overhead) but
    # clamped to the padded batch; for real workloads keep >= ~4 grid steps
    # per TensorCore so the BlockSpec pipeline overlaps DMA with compute.
    batch_block = max(8, min(batch_block, _round_up(B, 8)))
    b_pad = _round_up(B, batch_block)
    vocab_lanes = _round_up(vocab, 128)

    # Token ids (pad id 0: padded tokens never reach an unmasked conv output),
    # laid out (b_pad*l_pad, 1) so the kernel's one-hot compare is a pure
    # lane-broadcast (no in-kernel relayout of the ids).
    ids = jnp.zeros((b_pad, l_pad), jnp.int32).at[:B, :L].set(
        token_ids.astype(jnp.int32))
    ids = ids.reshape(b_pad * l_pad, 1)

    # Embedding table, zero-padded to 128 sublanes, MXU operand dtype.
    table = jnp.zeros((vocab_lanes, E), mxu_dtype).at[:vocab, :].set(
        embed_table.astype(mxu_dtype))

    # Fused im2col conv weight (k_max*E, 128): rows [i*E:(i+1)*E] = tap i,
    # columns [j*C:(j+1)*C] = window j (zero for taps i >= K_j and for ALL
    # padded lanes >= n_win*C -- the FC depends on those staying zero).
    wflat = jnp.zeros((k_max * E, C_PAD), mxu_dtype)
    for j, w in enumerate(conv_ws):
        for i in range(w.shape[0]):
            wflat = wflat.at[i * E:(i + 1) * E, j * C:(j + 1) * C].set(
                w[i].astype(mxu_dtype))

    # Additive pooling mask with the conv bias folded in:
    #   maskb[t, c] = bias[c] if conv position t is valid for c's window,
    #                 else -1e30.   (exact: no ReLU, max over t)
    maskb = jnp.zeros((t_pool, C_PAD), jnp.float32)
    t_idx = jnp.arange(t_pool, dtype=jnp.int32)[:, None]
    for j, (w, b) in enumerate(zip(conv_ws, conv_bs)):
        k_j = w.shape[0]
        col = jnp.where(t_idx < (L - k_j + 1),
                        b.reshape(1, -1).astype(jnp.float32), -1e30)
        maskb = maskb.at[:, j * C:(j + 1) * C].set(col)

    # Lane-dense padded FC (real logits in columns [:num_class]); rows beyond
    # n_win*C stay exactly zero (see note above).
    fcw = jnp.zeros((C_PAD, N_PAD), mxu_dtype).at[:n_win * C, :num_class].set(
        fc_w.astype(mxu_dtype))
    fcb = jnp.zeros((1, N_PAD), jnp.float32).at[0, :num_class].set(
        fc_b.reshape(-1).astype(jnp.float32))

    grid = (b_pad // batch_block,)
    kernel = functools.partial(textcnn_kernel, t_pool=t_pool, l_pad=l_pad,
                               e_dim=E, k_max=k_max)

    w_item = jnp.dtype(mxu_dtype).itemsize
    flops = grid[0] * (2 * batch_block * l_pad * vocab_lanes * E
                       + 2 * batch_block * t_pool * (k_max * E) * C_PAD
                       + 2 * batch_block * C_PAD * N_PAD)
    bytes_accessed = (b_pad * l_pad * 4                       # token ids
                      + vocab_lanes * E * w_item              # table
                      + k_max * E * C_PAD * w_item            # conv weight
                      + t_pool * C_PAD * 4                    # mask+bias
                      + C_PAD * N_PAD * w_item + N_PAD * 4    # fc
                      + b_pad * N_PAD * 4)                    # output

    out = pl.pallas_call(
        kernel,
        out_shape=jax.ShapeDtypeStruct((b_pad, N_PAD), jnp.float32),
        grid_spec=pltpu.PrefetchScalarGridSpec(
            num_scalar_prefetch=0,
            grid=grid,
            in_specs=[
                pl.BlockSpec((batch_block * l_pad, 1), lambda b: (b, 0)),  # ids
                pl.BlockSpec((vocab_lanes, E), lambda b: (0, 0)),          # table
                pl.BlockSpec((k_max * E, C_PAD), lambda b: (0, 0)),        # conv w
                pl.BlockSpec((t_pool, C_PAD), lambda b: (0, 0)),           # mask+bias
                pl.BlockSpec((C_PAD, N_PAD), lambda b: (0, 0)),            # fc w
                pl.BlockSpec((1, N_PAD), lambda b: (0, 0)),                # fc b
            ],
            out_specs=pl.BlockSpec((batch_block, N_PAD), lambda b: (b, 0)),
        ),
        compiler_params=pltpu.CompilerParams(
            dimension_semantics=("parallel",),     # megacore / v7x 2-TC shard
            # After the repack the per-tile footprint is only a few MiB even at
            # batch_block=256; 48 MiB leaves headroom on every gen (<= v7x's
            # 64 MiB physical, well under v5e/v6e's 128 MiB).
            vmem_limit_bytes=48 * 1024 * 1024),
        cost_estimate=pl.CostEstimate(flops=int(flops), transcendentals=0,
                                      bytes_accessed=int(bytes_accessed)),
    )(ids, table, wflat, maskb, fcw, fcb)

    return out[:B, :num_class]


def ref_forward(emb_x, conv_ws, conv_bs, fc_w, fc_b):
    """Pure-JAX reference of the PyTorch forward (eval mode)."""
    B, L, E = emb_x.shape
    pooled = []
    for w, b in zip(conv_ws, conv_bs):
        K, _, C = w.shape
        T = L - K + 1
        acc = jnp.zeros((B, T, C), jnp.float32)
        for i in range(K):
            acc = acc + jnp.einsum('bte,ec->btc', emb_x[:, i:i + T, :], w[i])
        pooled.append(jnp.max(acc, axis=1) + b)
    feat = jnp.concatenate(pooled, axis=-1)
    return feat @ fc_w + fc_b


if __name__ == "__main__":
    # Small deterministic configuration consistent with the module's __init__.
    vocab_size, emb_dim = 50, 32        # vocab_built.vectors: (50, 32)
    dim_channel = 8
    num_class = 4
    B, L = 16, 16

    key = jax.random.PRNGKey(0)
    keys = jax.random.split(key, 10)

    embed_table = 0.1 * jax.random.normal(keys[0], (vocab_size, emb_dim),
                                          jnp.float32)
    conv_ws, conv_bs = [], []
    for j, K in enumerate(KERNEL_WINS):
        conv_ws.append(0.1 * jax.random.normal(
            keys[1 + j], (K, emb_dim, dim_channel), jnp.float32))
        conv_bs.append(0.1 * jax.random.normal(
            keys[4 + j], (1, dim_channel), jnp.float32))
    fc_w = 0.1 * jax.random.normal(
        keys[7], (len(KERNEL_WINS) * dim_channel, num_class), jnp.float32)
    fc_b = 0.1 * jax.random.normal(keys[8], (1, num_class), jnp.float32)

    x_ids = jax.random.randint(keys[9], (B, L), 0, vocab_size, jnp.int32)

    # Reference (plain-JAX embedding lookup only used for the expected value).
    emb_x = embed_table[x_ids]                  # (B, L, E)
    expected = ref_forward(emb_x, conv_ws, conv_bs, fc_w, fc_b)

    # f32 MXU operands: exact semantics of the PyTorch module.
    logits_f32 = jax.block_until_ready(
        textcnn_forward(x_ids, embed_table, conv_ws, conv_bs, fc_w, fc_b,
                        num_class, mxu_dtype=jnp.float32))
    assert logits_f32.shape == (B, num_class)
    assert jnp.allclose(logits_f32, expected, atol=1e-4, rtol=1e-4)

    # Default path: bf16 MXU operands (all gens), f32 accumulation.
    logits_bf16 = jax.block_until_ready(
        textcnn_forward(x_ids, embed_table, conv_ws, conv_bs, fc_w, fc_b,
                        num_class))
    assert logits_bf16.shape == (B, num_class)
    assert jnp.allclose(logits_bf16, expected, atol=3e-2, rtol=3e-2)

    print("KERNEL_OK")
</pallas_src>

<mosaic_0001>
module attributes {stable_mosaic.version = 11 : i64} {
  func.func @textcnn_kernel(%arg0: i32, %arg1: memref<384x1xi32, #tpu.memory_space<vmem>>, %arg2: memref<128x32xf32, #tpu.memory_space<vmem>>, %arg3: memref<160x128xf32, #tpu.memory_space<vmem>>, %arg4: memref<16x128xf32, #tpu.memory_space<vmem>>, %arg5: memref<128x128xf32, #tpu.memory_space<vmem>>, %arg6: memref<1x128xf32, #tpu.memory_space<vmem>>, %arg7: memref<16x128xf32, #tpu.memory_space<vmem>>) attributes {dimension_semantics = [#tpu.dimension_semantics<parallel>], iteration_bounds = array<i64: 1>, scalar_prefetch = 0 : i64, scratch_operands = 0 : i64, tpu.core_type = #tpu.core_type<tc>, window_params = [{transform_indices = @transform_0, window_bounds = array<i64: 384, 1>}, {pipeline_mode = #tpu.pipeline_mode<synchronous>, transform_indices = @transform_1, window_bounds = array<i64: 128, 32>}, {pipeline_mode = #tpu.pipeline_mode<synchronous>, transform_indices = @transform_2, window_bounds = array<i64: 160, 128>}, {pipeline_mode = #tpu.pipeline_mode<synchronous>, transform_indices = @transform_3, window_bounds = array<i64: 16, 128>}, {pipeline_mode = #tpu.pipeline_mode<synchronous>, transform_indices = @transform_4, window_bounds = array<i64: 128, 128>}, {pipeline_mode = #tpu.pipeline_mode<synchronous>, transform_indices = @transform_5, window_bounds = array<i64: 1, 128>}, {transform_indices = @transform_6, window_bounds = array<i64: 16, 128>}]} {
    %0 = tpu.iota {dimensions = array<i32: 1>} : vector<384x128xi32>
    %c0 = arith.constant 0 : index
    %c0_0 = arith.constant 0 : index
    %1 = vector.load %arg1[%c0, %c0_0] : memref<384x1xi32, #tpu.memory_space<vmem>>, vector<384x1xi32>
    %2 = vector.broadcast %1 : vector<384x1xi32> to vector<384x128xi32>
    %3 = arith.cmpi eq, %0, %2 : vector<384x128xi32>
    %4 = arith.extui %3 : vector<384x128xi1> to vector<384x128xi32>
    %5 = arith.sitofp %4 : vector<384x128xi32> to vector<384x128xf32>
    %c0_1 = arith.constant 0 : index
    %c0_2 = arith.constant 0 : index
    %6 = vector.load %arg2[%c0_1, %c0_2] : memref<128x32xf32, #tpu.memory_space<vmem>>, vector<128x32xf32>
    %cst = arith.constant dense<0.000000e+00> : vector<384x32xf32>
    %7 = tpu.matmul %5, %6, %cst {dimension_numbers = #tpu.dot_dimension_numbers<[1], [0], [0], [1], [0, 0, 1, 1], [], []>} : vector<384x128xf32>, vector<128x32xf32>, vector<384x32xf32> -> vector<384x32xf32>
    %8 = vector.shape_cast %7 : vector<384x32xf32> to vector<16x24x32xf32>
    %9 = vector.extract_strided_slice %8 {offsets = [0, 0, 0], sizes = [16, 16, 32], strides = [1, 1, 1]} : vector<16x24x32xf32> to vector<16x16x32xf32>
    %10 = vector.extract_strided_slice %8 {offsets = [0, 1, 0], sizes = [16, 16, 32], strides = [1, 1, 1]} : vector<16x24x32xf32> to vector<16x16x32xf32>
    %11 = vector.extract_strided_slice %8 {offsets = [0, 2, 0], sizes = [16, 16, 32], strides = [1, 1, 1]} : vector<16x24x32xf32> to vector<16x16x32xf32>
    %12 = vector.extract_strided_slice %8 {offsets = [0, 3, 0], sizes = [16, 16, 32], strides = [1, 1, 1]} : vector<16x24x32xf32> to vector<16x16x32xf32>
    %13 = vector.extract_strided_slice %8 {offsets = [0, 4, 0], sizes = [16, 16, 32], strides = [1, 1, 1]} : vector<16x24x32xf32> to vector<16x16x32xf32>
    %14 = tpu.concatenate %9, %10, %11, %12, %13 in 2 : vector<16x16x32xf32>, vector<16x16x32xf32>, vector<16x16x32xf32>, vector<16x16x32xf32>, vector<16x16x32xf32> -> vector<16x16x160xf32>
    %15 = vector.shape_cast %14 : vector<16x16x160xf32> to vector<256x160xf32>
    %c0_3 = arith.constant 0 : index
    %c0_4 = arith.constant 0 : index
    %16 = vector.load %arg3[%c0_3, %c0_4] : memref<160x128xf32, #tpu.memory_space<vmem>>, vector<160x128xf32>
    %cst_5 = arith.constant dense<0.000000e+00> : vector<256x128xf32>
    %17 = tpu.matmul %15, %16, %cst_5 {dimension_numbers = #tpu.dot_dimension_numbers<[1], [0], [0], [1], [0, 0, 1, 1], [], []>} : vector<256x160xf32>, vector<160x128xf32>, vector<256x128xf32> -> vector<256x128xf32>
    %18 = vector.shape_cast %17 : vector<256x128xf32> to vector<16x16x128xf32>
    %c0_6 = arith.constant 0 : index
    %c0_7 = arith.constant 0 : index
    %19 = vector.load %arg4[%c0_6, %c0_7] : memref<16x128xf32, #tpu.memory_space<vmem>>, vector<16x128xf32>
    %20 = vector.shape_cast %19 : vector<16x128xf32> to vector<1x16x128xf32>
    %21 = vector.broadcast %20 : vector<1x16x128xf32> to vector<16x16x128xf32>
    %22 = arith.addf %18, %21 : vector<16x16x128xf32>
    %cst_8 = arith.constant dense<0xFF800000> : vector<16x128xf32>
    %23 = vector.multi_reduction <maximumf>, %22, %cst_8 [1] : vector<16x16x128xf32> to vector<16x128xf32>
    %c0_9 = arith.constant 0 : index
    %c0_10 = arith.constant 0 : index
    %24 = vector.load %arg5[%c0_9, %c0_10] : memref<128x128xf32, #tpu.memory_space<vmem>>, vector<128x128xf32>
    %cst_11 = arith.constant dense<0.000000e+00> : vector<16x128xf32>
    %25 = tpu.matmul %23, %24, %cst_11 {dimension_numbers = #tpu.dot_dimension_numbers<[1], [0], [0], [1], [0, 0, 1, 1], [], []>} : vector<16x128xf32>, vector<128x128xf32>, vector<16x128xf32> -> vector<16x128xf32>
    %c0_12 = arith.constant 0 : index
    %c0_13 = arith.constant 0 : index
    %26 = vector.load %arg6[%c0_12, %c0_13] : memref<1x128xf32, #tpu.memory_space<vmem>>, vector<1x128xf32>
    %27 = vector.broadcast %26 : vector<1x128xf32> to vector<16x128xf32>
    %28 = arith.addf %25, %27 : vector<16x128xf32>
    %c0_14 = arith.constant 0 : index
    %c0_15 = arith.constant 0 : index
    %29 = vector.load %arg7[%c0_14, %c0_15] : memref<16x128xf32, #tpu.memory_space<vmem>>, vector<16x128xf32>
    tpu.vector_store %arg7[%c0_14, %c0_15], %28 {strides = array<i32>} : memref<16x128xf32, #tpu.memory_space<vmem>>, vector<16x128xf32>,
    return
  }
  func.func @transform_0(%arg0: i32) -> (i32, i32) {
    %c0_i32 = arith.constant 0 : i32
    %c0_i32_0 = arith.constant 0 : i32
    return %arg0, %c0_i32 : i32, i32
  }
  func.func @transform_1(%arg0: i32) -> (i32, i32) {
    %c0_i32 = arith.constant 0 : i32
    %c0_i32_0 = arith.constant 0 : i32
    %c0_i32_1 = arith.constant 0 : i32
    return %c0_i32, %c0_i32_0 : i32, i32
  }
  func.func @transform_2(%arg0: i32) -> (i32, i32) {
    %c0_i32 = arith.constant 0 : i32
    %c0_i32_0 = arith.constant 0 : i32
    %c0_i32_1 = arith.constant 0 : i32
    return %c0_i32, %c0_i32_0 : i32, i32
  }
  func.func @transform_3(%arg0: i32) -> (i32, i32) {
    %c0_i32 = arith.constant 0 : i32
    %c0_i32_0 = arith.constant 0 : i32
    %c0_i32_1 = arith.constant 0 : i32
    return %c0_i32, %c0_i32_0 : i32, i32
  }
  func.func @transform_4(%arg0: i32) -> (i32, i32) {
    %c0_i32 = arith.constant 0 : i32
    %c0_i32_0 = arith.constant 0 : i32
    %c0_i32_1 = arith.constant 0 : i32
    return %c0_i32, %c0_i32_0 : i32, i32
  }
  func.func @transform_5(%arg0: i32) -> (i32, i32) {
    %c0_i32 = arith.constant 0 : i32
    %c0_i32_0 = arith.constant 0 : i32
    %c0_i32_1 = arith.constant 0 : i32
    return %c0_i32, %c0_i32_0 : i32, i32
  }
  func.func @transform_6(%arg0: i32) -> (i32, i32) {
    %c0_i32 = arith.constant 0 : i32
    %c0_i32_0 = arith.constant 0 : i32
    return %arg0, %c0_i32 : i32, i32
  }
}

</mosaic_0001>

<llo_original>
// kernel: tpu_custom_call.1
$region0: #{tpu_custom_call.1}
  #allocation0 [shape = 'u32[]', space=smem, size = 0x4, offset = 0x4, fixed_abs, tag = 'smem constant byte address 0x4 - core index']
  #allocation1 [shape = 'u32[72,128]{1,0:T(1,128)}', space=vmem, size = 0x9000, scoped, tag = 'internal scratch']
  %s0 = inlined_call_operand.vmem [shape: s32[384,1], index: 0, kind: input, shape index: {}]
  %s1 = inlined_call_operand.vmem [shape: f32[128,32], index: 1, kind: input, shape index: {}]
  %s2 = inlined_call_operand.vmem [shape: f32[160,128], index: 2, kind: input, shape index: {}]
  %s3 = inlined_call_operand.vmem [shape: f32[16,128], index: 3, kind: input, shape index: {}]
  %s4 = inlined_call_operand.vmem [shape: f32[128,128], index: 4, kind: input, shape index: {}]
  %s5 = inlined_call_operand.vmem [shape: f32[1,128], index: 5, kind: input, shape index: {}]
  %s6 = inlined_call_operand.hbm [shape: f32[16,128], index: 6, kind: output, shape index: {}]
  %s7 = sld [smem:[#allocation0]]
  $region34: #{tpu_custom_call.1} parent=0
    _
  %s9 = ssub.s32 1, %s7
  %s10 = scalar_select 0, %s9, %s7
  $region1: #{tpu_custom_call.1} parent=0
    #allocation2 [shape = 'u8[8192]{0}', space=vmem, size = 0x2000, scoped, tag = 'output window, operand 0, single buffered']
    #allocation3 [shape = 's32[1]{0}', space=sflag, size = 0x4, scoped, tag = 'scoped memory for tpu_custom_call.1']
    %11 = vsyncpa [#allocation3], 0
    // Predicated region
    $region2: #{tpu_custom_call.1} parent=1 // pred_check
      _
    $region3: #{tpu_custom_call.1} parent=1 // pred_check_branch
      %13 = sbr.rel (0) target = $region5
    $region4: #{tpu_custom_call.1} parent=1 // pred_region
      _
    $region5: #{tpu_custom_call.1} parent=1 // pred_fallthru
      _
    // Predicated region
    $region6: #{tpu_custom_call.1} parent=1 // pred_check
      _
    $region7: #{tpu_custom_call.1} parent=1 // pred_check_branch
      %15 = sbr.rel (0) target = $region9
    $region8: #{tpu_custom_call.1} parent=1 // pred_region
      _
    $region9: #{tpu_custom_call.1} parent=1 // pred_fallthru
      _
    // Predicated region
    $region10: #{tpu_custom_call.1} parent=1 // pred_check
      _
    $region11: #{tpu_custom_call.1} parent=1 // pred_check_branch
      %17 = sbr.rel (0) target = $region13
    $region12: #{tpu_custom_call.1} parent=1 // pred_region
      _
    $region13: #{tpu_custom_call.1} parent=1 // pred_fallthru
      _
    // Predicated region
    $region14: #{tpu_custom_call.1} parent=1 // pred_check
      _
    $region15: #{tpu_custom_call.1} parent=1 // pred_check_branch
      %19 = sbr.rel (0) target = $region17
    $region16: #{tpu_custom_call.1} parent=1 // pred_region
      _
    $region17: #{tpu_custom_call.1} parent=1 // pred_fallthru
      _
    // Predicated region
    $region18: #{tpu_custom_call.1} parent=1 // pred_check
      _
    $region19: #{tpu_custom_call.1} parent=1 // pred_check_branch
      %21 = sbr.rel (0) target = $region21
    $region20: #{tpu_custom_call.1} parent=1 // pred_region
      _
    $region21: #{tpu_custom_call.1} parent=1 // pred_fallthru
      _
    // Predicated region
    $region22: #{tpu_custom_call.1} parent=1 // pred_check
      _
    $region23: #{tpu_custom_call.1} parent=1 // pred_check_branch
      %23 = sbr.rel (0) target = $region25
    $region24: #{tpu_custom_call.1} parent=1 // pred_region
      _
    $region25: #{tpu_custom_call.1} parent=1 // pred_fallthru
      _
    %v24 = vlaneseq
    %v25 = vand.u32 %v24, 127
    %v26 = vld [vmem:[%s0] sm:$0xff]
    %v27 = vld [vmem:[%s0 + $0x8] sm:$0xff]
    %v28 = vld [vmem:[%s0 + $0x10] sm:$0xff]
    %v29 = vld [vmem:[%s0 + $0x18] sm:$0xff]
    %v30 = vld [vmem:[%s0 + $0x20] sm:$0xff]
    %v31 = vld [vmem:[%s0 + $0x28] sm:$0xff]
    %v32 = vld [vmem:[%s0 + $0x30] sm:$0xff]
    %v33 = vld [vmem:[%s0 + $0x38] sm:$0xff]
    %v34 = vld [vmem:[%s0 + $0x40] sm:$0xff]
    %v35 = vld [vmem:[%s0 + $0x48] sm:$0xff]
    %v36 = vld [vmem:[%s0 + $0x50] sm:$0xff]
    %v37 = vld [vmem:[%s0 + $0x58] sm:$0xff]
    %v38 = vld [vmem:[%s0 + $0x60] sm:$0xff]
    %v39 = vld [vmem:[%s0 + $0x68] sm:$0xff]
    %v40 = vld [vmem:[%s0 + $0x70] sm:$0xff]
    %v41 = vld [vmem:[%s0 + $0x78] sm:$0xff]
    %v42 = vld [vmem:[%s0 + $0x80] sm:$0xff]
    %v43 = vld [vmem:[%s0 + $0x88] sm:$0xff]
    %v44 = vld [vmem:[%s0 + $0x90] sm:$0xff]
    %v45 = vld [vmem:[%s0 + $0x98] sm:$0xff]
    %v46 = vld [vmem:[%s0 + $0xa0] sm:$0xff]
    %v47 = vld [vmem:[%s0 + $0xa8] sm:$0xff]
    %v48 = vld [vmem:[%s0 + $0xb0] sm:$0xff]
    %v49 = vld [vmem:[%s0 + $0xb8] sm:$0xff]
    %v50 = vld [vmem:[%s0 + $0xc0] sm:$0xff]
    %v51 = vld [vmem:[%s0 + $0xc8] sm:$0xff]
    %v52 = vld [vmem:[%s0 + $0xd0] sm:$0xff]
    %v53 = vld [vmem:[%s0 + $0xd8] sm:$0xff]
    %v54 = vld [vmem:[%s0 + $0xe0] sm:$0xff]
    %v55 = vld [vmem:[%s0 + $0xe8] sm:$0xff]
    %v56 = vld [vmem:[%s0 + $0xf0] sm:$0xff]
    %v57 = vld [vmem:[%s0 + $0xf8] sm:$0xff]
    %v58 = vld [vmem:[%s0 + $0x100] sm:$0xff]
    %v59 = vld [vmem:[%s0 + $0x108] sm:$0xff]
    %v60 = vld [vmem:[%s0 + $0x110] sm:$0xff]
    %v61 = vld [vmem:[%s0 + $0x118] sm:$0xff]
    %v62 = vld [vmem:[%s0 + $0x120] sm:$0xff]
    %v63 = vld [vmem:[%s0 + $0x128] sm:$0xff]
    %v64 = vld [vmem:[%s0 + $0x130] sm:$0xff]
    %v65 = vld [vmem:[%s0 + $0x138] sm:$0xff]
    %v66 = vld [vmem:[%s0 + $0x140] sm:$0xff]
    %v67 = vld [vmem:[%s0 + $0x148] sm:$0xff]
    %v68 = vld [vmem:[%s0 + $0x150] sm:$0xff]
    %v69 = vld [vmem:[%s0 + $0x158] sm:$0xff]
    %v70 = vld [vmem:[%s0 + $0x160] sm:$0xff]
    %v71 = vld [vmem:[%s0 + $0x168] sm:$0xff]
    %v72 = vld [vmem:[%s0 + $0x170] sm:$0xff]
    %v73 = vld [vmem:[%s0 + $0x178] sm:$0xff]
    %74 = vset.pattern.permute.xlu0 0
    %75 = vperm.xlu0 %74, %v26
    %v76 = vpop.permute.xlu0 %75
    %77 = vset.pattern.permute.xlu0 0
    %78 = vperm.xlu0 %77, %v27
    %v79 = vpop.permute.xlu0 %78
    %80 = vset.pattern.permute.xlu0 0
    %81 = vperm.xlu0 %80, %v28
    %v82 = vpop.permute.xlu0 %81
    %83 = vset.pattern.permute.xlu0 0
    %84 = vperm.xlu0 %83, %v29
    %v85 = vpop.permute.xlu0 %84
    %86 = vset.pattern.permute.xlu0 0
    %87 = vperm.xlu0 %86, %v30
    %v88 = vpop.permute.xlu0 %87
    %89 = vset.pattern.permute.xlu0 0
    %90 = vperm.xlu0 %89, %v31
    %v91 = vpop.permute.xlu0 %90
    %92 = vset.pattern.permute.xlu0 0
    %93 = vperm.xlu0 %92, %v32
    %v94 = vpop.permute.xlu0 %93
    %95 = vset.pattern.permute.xlu0 0
    %96 = vperm.xlu0 %95, %v33
    %v97 = vpop.permute.xlu0 %96
    %98 = vset.pattern.permute.xlu0 0
    %99 = vperm.xlu0 %98, %v34
    %v100 = vpop.permute.xlu0 %99
    %101 = vset.pattern.permute.xlu0 0
    %102 = vperm.xlu0 %101, %v35
    %v103 = vpop.permute.xlu0 %102
    %104 = vset.pattern.permute.xlu0 0
    %105 = vperm.xlu0 %104, %v36
    %v106 = vpop.permute.xlu0 %105
    %107 = vset.pattern.permute.xlu0 0
    %108 = vperm.xlu0 %107, %v37
    %v109 = vpop.permute.xlu0 %108
    %110 = vset.pattern.permute.xlu0 0
    %111 = vperm.xlu0 %110, %v38
    %v112 = vpop.permute.xlu0 %111
    %113 = vset.pattern.permute.xlu0 0
    %114 = vperm.xlu0 %113, %v39
    %v115 = vpop.permute.xlu0 %114
    %116 = vset.pattern.permute.xlu0 0
    %117 = vperm.xlu0 %116, %v40
    %v118 = vpop.permute.xlu0 %117
    %119 = vset.pattern.permute.xlu0 0
    %120 = vperm.xlu0 %119, %v41
    %v121 = vpop.permute.xlu0 %120
    %122 = vset.pattern.permute.xlu0 0
    %123 = vperm.xlu0 %122, %v42
    %v124 = vpop.permute.xlu0 %123
    %125 = vset.pattern.permute.xlu0 0
    %126 = vperm.xlu0 %125, %v43
    %v127 = vpop.permute.xlu0 %126
    %128 = vset.pattern.permute.xlu0 0
    %129 = vperm.xlu0 %128, %v44
    %v130 = vpop.permute.xlu0 %129
    %131 = vset.pattern.permute.xlu0 0
    %132 = vperm.xlu0 %131, %v45
    %v133 = vpop.permute.xlu0 %132
    %134 = vset.pattern.permute.xlu0 0
    %135 = vperm.xlu0 %134, %v46
    %v136 = vpop.permute.xlu0 %135
    %137 = vset.pattern.permute.xlu0 0
    %138 = vperm.xlu0 %137, %v47
    %v139 = vpop.permute.xlu0 %138
    %140 = vset.pattern.permute.xlu0 0
    %141 = vperm.xlu0 %140, %v48
    %v142 = vpop.permute.xlu0 %141
    %143 = vset.pattern.permute.xlu0 0
    %144 = vperm.xlu0 %143, %v49
    %v145 = vpop.permute.xlu0 %144
    %146 = vset.pattern.permute.xlu0 0
    %147 = vperm.xlu0 %146, %v50
    %v148 = vpop.permute.xlu0 %147
    %149 = vset.pattern.permute.xlu0 0
    %150 = vperm.xlu0 %149, %v51
    %v151 = vpop.permute.xlu0 %150
    %152 = vset.pattern.permute.xlu0 0
    %153 = vperm.xlu0 %152, %v52
    %v154 = vpop.permute.xlu0 %153
    %155 = vset.pattern.permute.xlu0 0
    %156 = vperm.xlu0 %155, %v53
    %v157 = vpop.permute.xlu0 %156
    %158 = vset.pattern.permute.xlu0 0
    %159 = vperm.xlu0 %158, %v54
    %v160 = vpop.permute.xlu0 %159
    %161 = vset.pattern.permute.xlu0 0
    %162 = vperm.xlu0 %161, %v55
    %v163 = vpop.permute.xlu0 %162
    %164 = vset.pattern.permute.xlu0 0
    %165 = vperm.xlu0 %164, %v56
    %v166 = vpop.permute.xlu0 %165
    %167 = vset.pattern.permute.xlu0 0
    %168 = vperm.xlu0 %167, %v57
    %v169 = vpop.permute.xlu0 %168
    %170 = vset.pattern.permute.xlu0 0
    %171 = vperm.xlu0 %170, %v58
    %v172 = vpop.permute.xlu0 %171
    %173 = vset.pattern.permute.xlu0 0
    %174 = vperm.xlu0 %173, %v59
    %v175 = vpop.permute.xlu0 %174
    %176 = vset.pattern.permute.xlu0 0
    %177 = vperm.xlu0 %176, %v60
    %v178 = vpop.permute.xlu0 %177
    %179 = vset.pattern.permute.xlu0 0
    %180 = vperm.xlu0 %179, %v61
    %v181 = vpop.permute.xlu0 %180
    %182 = vset.pattern.permute.xlu0 0
    %183 = vperm.xlu0 %182, %v62
    %v184 = vpop.permute.xlu0 %183
    %185 = vset.pattern.permute.xlu0 0
    %186 = vperm.xlu0 %185, %v63
    %v187 = vpop.permute.xlu0 %186
    %188 = vset.pattern.permute.xlu0 0
    %189 = vperm.xlu0 %188, %v64
    %v190 = vpop.permute.xlu0 %189
    %191 = vset.pattern.permute.xlu0 0
    %192 = vperm.xlu0 %191, %v65
    %v193 = vpop.permute.xlu0 %192
    %194 = vset.pattern.permute.xlu0 0
    %195 = vperm.xlu0 %194, %v66
    %v196 = vpop.permute.xlu0 %195
    %197 = vset.pattern.permute.xlu0 0
    %198 = vperm.xlu0 %197, %v67
    %v199 = vpop.permute.xlu0 %198
    %200 = vset.pattern.permute.xlu0 0
    %201 = vperm.xlu0 %200, %v68
    %v202 = vpop.permute.xlu0 %201
    %203 = vset.pattern.permute.xlu0 0
    %204 = vperm.xlu0 %203, %v69
    %v205 = vpop.permute.xlu0 %204
    %206 = vset.pattern.permute.xlu0 0
    %207 = vperm.xlu0 %206, %v70
    %v208 = vpop.permute.xlu0 %207
    %209 = vset.pattern.permute.xlu0 0
    %210 = vperm.xlu0 %209, %v71
    %v211 = vpop.permute.xlu0 %210
    %212 = vset.pattern.permute.xlu0 0
    %213 = vperm.xlu0 %212, %v72
    %v214 = vpop.permute.xlu0 %213
    %215 = vset.pattern.permute.xlu0 0
    %216 = vperm.xlu0 %215, %v73
    %v217 = vpop.permute.xlu0 %216
    %vm218 = vcmp.eq.s32.totalorder %v25, %v76
    %vm219 = vcmp.eq.s32.totalorder %v25, %v79
    %vm220 = vcmp.eq.s32.totalorder %v25, %v82
    %vm221 = vcmp.eq.s32.totalorder %v25, %v85
    %vm222 = vcmp.eq.s32.totalorder %v25, %v88
    %vm223 = vcmp.eq.s32.totalorder %v25, %v91
    %vm224 = vcmp.eq.s32.totalorder %v25, %v94
    %vm225 = vcmp.eq.s32.totalorder %v25, %v97
    %vm226 = vcmp.eq.s32.totalorder %v25, %v100
    %vm227 = vcmp.eq.s32.totalorder %v25, %v103
    %vm228 = vcmp.eq.s32.totalorder %v25, %v106
    %vm229 = vcmp.eq.s32.totalorder %v25, %v109
    %vm230 = vcmp.eq.s32.totalorder %v25, %v112
    %vm231 = vcmp.eq.s32.totalorder %v25, %v115
    %vm232 = vcmp.eq.s32.totalorder %v25, %v118
    %vm233 = vcmp.eq.s32.totalorder %v25, %v121
    %vm234 = vcmp.eq.s32.totalorder %v25, %v124
    %vm235 = vcmp.eq.s32.totalorder %v25, %v127
    %vm236 = vcmp.eq.s32.totalorder %v25, %v130
    %vm237 = vcmp.eq.s32.totalorder %v25, %v133
    %vm238 = vcmp.eq.s32.totalorder %v25, %v136
    %vm239 = vcmp.eq.s32.totalorder %v25, %v139
    %vm240 = vcmp.eq.s32.totalorder %v25, %v142
    %vm241 = vcmp.eq.s32.totalorder %v25, %v145
    %vm242 = vcmp.eq.s32.totalorder %v25, %v148
    %vm243 = vcmp.eq.s32.totalorder %v25, %v151
    %vm244 = vcmp.eq.s32.totalorder %v25, %v154
    %vm245 = vcmp.eq.s32.totalorder %v25, %v157
    %vm246 = vcmp.eq.s32.totalorder %v25, %v160
    %vm247 = vcmp.eq.s32.totalorder %v25, %v163
    %vm248 = vcmp.eq.s32.totalorder %v25, %v166
    %vm249 = vcmp.eq.s32.totalorder %v25, %v169
    %vm250 = vcmp.eq.s32.totalorder %v25, %v172
    %vm251 = vcmp.eq.s32.totalorder %v25, %v175
    %vm252 = vcmp.eq.s32.totalorder %v25, %v178
    %vm253 = vcmp.eq.s32.totalorder %v25, %v181
    %vm254 = vcmp.eq.s32.totalorder %v25, %v184
    %vm255 = vcmp.eq.s32.totalorder %v25, %v187
    %vm256 = vcmp.eq.s32.totalorder %v25, %v190
    %vm257 = vcmp.eq.s32.totalorder %v25, %v193
    %vm258 = vcmp.eq.s32.totalorder %v25, %v196
    %vm259 = vcmp.eq.s32.totalorder %v25, %v199
    %vm260 = vcmp.eq.s32.totalorder %v25, %v202
    %vm261 = vcmp.eq.s32.totalorder %v25, %v205
    %vm262 = vcmp.eq.s32.totalorder %v25, %v208
    %vm263 = vcmp.eq.s32.totalorder %v25, %v211
    %vm264 = vcmp.eq.s32.totalorder %v25, %v214
    %vm265 = vcmp.eq.s32.totalorder %v25, %v217
    %v266 = vsel %vm218, 1, 0
    %v267 = vsel %vm219, 1, 0
    %v268 = vsel %vm220, 1, 0
    %v269 = vsel %vm221, 1, 0
    %v270 = vsel %vm222, 1, 0
    %v271 = vsel %vm223, 1, 0
    %v272 = vsel %vm224, 1, 0
    %v273 = vsel %vm225, 1, 0
    %v274 = vsel %vm226, 1, 0
    %v275 = vsel %vm227, 1, 0
    %v276 = vsel %vm228, 1, 0
    %v277 = vsel %vm229, 1, 0
    %v278 = vsel %vm230, 1, 0
    %v279 = vsel %vm231, 1, 0
    %v280 = vsel %vm232, 1, 0
    %v281 = vsel %vm233, 1, 0
    %v282 = vsel %vm234, 1, 0
    %v283 = vsel %vm235, 1, 0
    %v284 = vsel %vm236, 1, 0
    %v285 = vsel %vm237, 1, 0
    %v286 = vsel %vm238, 1, 0
    %v287 = vsel %vm239, 1, 0
    %v288 = vsel %vm240, 1, 0
    %v289 = vsel %vm241, 1, 0
    %v290 = vsel %vm242, 1, 0
    %v291 = vsel %vm243, 1, 0
    %v292 = vsel %vm244, 1, 0
    %v293 = vsel %vm245, 1, 0
    %v294 = vsel %vm246, 1, 0
    %v295 = vsel %vm247, 1, 0
    %v296 = vsel %vm248, 1, 0
    %v297 = vsel %vm249, 1, 0
    %v298 = vsel %vm250, 1, 0
    %v299 = vsel %vm251, 1, 0
    %v300 = vsel %vm252, 1, 0
    %v301 = vsel %vm253, 1, 0
    %v302 = vsel %vm254, 1, 0
    %v303 = vsel %vm255, 1, 0
    %v304 = vsel %vm256, 1, 0
    %v305 = vsel %vm257, 1, 0
    %v306 = vsel %vm258, 1, 0
    %v307 = vsel %vm259, 1, 0
    %v308 = vsel %vm260, 1, 0
    %v309 = vsel %vm261, 1, 0
    %v310 = vsel %vm262, 1, 0
    %v311 = vsel %vm263, 1, 0
    %v312 = vsel %vm264, 1, 0
    %v313 = vsel %vm265, 1, 0
    %v314 = vcvt.s32.f32 %v266
    %v315 = vcvt.s32.f32 %v267
    %v316 = vcvt.s32.f32 %v268
    %v317 = vcvt.s32.f32 %v269
    %v318 = vcvt.s32.f32 %v270
    %v319 = vcvt.s32.f32 %v271
    %v320 = vcvt.s32.f32 %v272
    %v321 = vcvt.s32.f32 %v273
    %v322 = vcvt.s32.f32 %v274
    %v323 = vcvt.s32.f32 %v275
    %v324 = vcvt.s32.f32 %v276
    %v325 = vcvt.s32.f32 %v277
    %v326 = vcvt.s32.f32 %v278
    %v327 = vcvt.s32.f32 %v279
    %v328 = vcvt.s32.f32 %v280
    %v329 = vcvt.s32.f32 %v281
    %v330 = vcvt.s32.f32 %v282
    %v331 = vcvt.s32.f32 %v283
    %v332 = vcvt.s32.f32 %v284
    %v333 = vcvt.s32.f32 %v285
    %v334 = vcvt.s32.f32 %v286
    %v335 = vcvt.s32.f32 %v287
    %v336 = vcvt.s32.f32 %v288
    %v337 = vcvt.s32.f32 %v289
    %v338 = vcvt.s32.f32 %v290
    %v339 = vcvt.s32.f32 %v291
    %v340 = vcvt.s32.f32 %v292
    %v341 = vcvt.s32.f32 %v293
    %v342 = vcvt.s32.f32 %v294
    %v343 = vcvt.s32.f32 %v295
    %v344 = vcvt.s32.f32 %v296
    %v345 = vcvt.s32.f32 %v297
    %v346 = vcvt.s32.f32 %v298
    %v347 = vcvt.s32.f32 %v299
    %v348 = vcvt.s32.f32 %v300
    %v349 = vcvt.s32.f32 %v301
    %v350 = vcvt.s32.f32 %v302
    %v351 = vcvt.s32.f32 %v303
    %v352 = vcvt.s32.f32 %v304
    %v353 = vcvt.s32.f32 %v305
    %v354 = vcvt.s32.f32 %v306
    %v355 = vcvt.s32.f32 %v307
    %v356 = vcvt.s32.f32 %v308
    %v357 = vcvt.s32.f32 %v309
    %v358 = vcvt.s32.f32 %v310
    %v359 = vcvt.s32.f32 %v311
    %v360 = vcvt.s32.f32 %v312
    %v361 = vcvt.s32.f32 %v313
    %v362 = vld [vmem:[%s1] sm:$0xff]
    %v363 = vld [vmem:[%s1 + $0x8] sm:$0xff]
    %v364 = vld [vmem:[%s1 + $0x10] sm:$0xff]
    %v365 = vld [vmem:[%s1 + $0x18] sm:$0xff]
    %v366 = vld [vmem:[%s1 + $0x20] sm:$0xff]
    %v367 = vld [vmem:[%s1 + $0x28] sm:$0xff]
    %v368 = vld [vmem:[%s1 + $0x30] sm:$0xff]
    %v369 = vld [vmem:[%s1 + $0x38] sm:$0xff]
    %v370 = vld [vmem:[%s1 + $0x40] sm:$0xff]
    %v371 = vld [vmem:[%s1 + $0x48] sm:$0xff]
    %v372 = vld [vmem:[%s1 + $0x50] sm:$0xff]
    %v373 = vld [vmem:[%s1 + $0x58] sm:$0xff]
    %v374 = vld [vmem:[%s1 + $0x60] sm:$0xff]
    %v375 = vld [vmem:[%s1 + $0x68] sm:$0xff]
    %v376 = vld [vmem:[%s1 + $0x70] sm:$0xff]
    %v377 = vld [vmem:[%s1 + $0x78] sm:$0xff]
    %378 = vmatpush.msra.mxu0 %v377
    %379 = vmatpush.msra.mxu0 %v376
    %380 = vmatpush.msra.mxu0 %v375
    %381 = vmatpush.msra.mxu0 %v374
    %382 = vmatpush.msra.mxu0 %v373
    %383 = vmatpush.msra.mxu0 %v372
    %384 = vmatpush.msra.mxu0 %v371
    %385 = vmatpush.msra.mxu0 %v370
    %386 = vmatpush.msra.mxu0 %v369
    %387 = vmatpush.msra.mxu0 %v368
    %388 = vmatpush.msra.mxu0 %v367
    %389 = vmatpush.msra.mxu0 %v366
    %390 = vmatpush.msra.mxu0 %v365
    %391 = vmatpush.msra.mxu0 %v364
    %392 = vmatpush.msra.mxu0 %v363
    %393 = vmatpush.msra.mxu0 %v362
    %394 = vmatmul.f32.gmra.mxu0 %v314
    %v395 = vpop.f32.mrf.mxu0
    %v396 = vadd.f32 0.0, %v395
    %397 = vmatmul.f32.gmra.mxu0 %v315
    %v398 = vpop.f32.mrf.mxu0
    %v399 = vadd.f32 0.0, %v398
    %400 = vmatmul.f32.gmra.mxu0 %v316
    %v401 = vpop.f32.mrf.mxu0
    %v402 = vadd.f32 0.0, %v401
    %403 = vmatmul.f32.gmra.mxu0 %v317
    %v404 = vpop.f32.mrf.mxu0
    %v405 = vadd.f32 0.0, %v404
    %406 = vmatmul.f32.gmra.mxu0 %v318
    %v407 = vpop.f32.mrf.mxu0
    %v408 = vadd.f32 0.0, %v407
    %409 = vmatmul.f32.gmra.mxu0 %v319
    %v410 = vpop.f32.mrf.mxu0
    %v411 = vadd.f32 0.0, %v410
    %412 = vmatmul.f32.gmra.mxu0 %v320
    %v413 = vpop.f32.mrf.mxu0
    %v414 = vadd.f32 0.0, %v413
    %415 = vmatmul.f32.gmra.mxu0 %v321
    %v416 = vpop.f32.mrf.mxu0
    %v417 = vadd.f32 0.0, %v416
    %418 = vmatmul.f32.gmra.mxu0 %v322
    %v419 = vpop.f32.mrf.mxu0
    %v420 = vadd.f32 0.0, %v419
    %421 = vmatmul.f32.gmra.mxu0 %v323
    %v422 = vpop.f32.mrf.mxu0
    %v423 = vadd.f32 0.0, %v422
    %424 = vmatmul.f32.gmra.mxu0 %v324
    %v425 = vpop.f32.mrf.mxu0
    %v426 = vadd.f32 0.0, %v425
    %427 = vmatmul.f32.gmra.mxu0 %v325
    %v428 = vpop.f32.mrf.mxu0
    %v429 = vadd.f32 0.0, %v428
    %430 = vmatmul.f32.gmra.mxu0 %v326
    %v431 = vpop.f32.mrf.mxu0
    %v432 = vadd.f32 0.0, %v431
    %433 = vmatmul.f32.gmra.mxu0 %v327
    %v434 = vpop.f32.mrf.mxu0
    %v435 = vadd.f32 0.0, %v434
    %436 = vmatmul.f32.gmra.mxu0 %v328
    %v437 = vpop.f32.mrf.mxu0
    %v438 = vadd.f32 0.0, %v437
    %439 = vmatmul.f32.gmra.mxu0 %v329
    %v440 = vpop.f32.mrf.mxu0
    %v441 = vadd.f32 0.0, %v440
    %442 = vmatmul.f32.gmra.mxu0 %v330
    %v443 = vpop.f32.mrf.mxu0
    %v444 = vadd.f32 0.0, %v443
    %445 = vmatmul.f32.gmra.mxu0 %v331
    %v446 = vpop.f32.mrf.mxu0
    %v447 = vadd.f32 0.0, %v446
    %448 = vmatmul.f32.gmra.mxu0 %v332
    %v449 = vpop.f32.mrf.mxu0
    %v450 = vadd.f32 0.0, %v449
    %451 = vmatmul.f32.gmra.mxu0 %v333
    %v452 = vpop.f32.mrf.mxu0
    %v453 = vadd.f32 0.0, %v452
    %454 = vmatmul.f32.gmra.mxu0 %v334
    %v455 = vpop.f32.mrf.mxu0
    %v456 = vadd.f32 0.0, %v455
    %457 = vmatmul.f32.gmra.mxu0 %v335
    %v458 = vpop.f32.mrf.mxu0
    %v459 = vadd.f32 0.0, %v458
    %460 = vmatmul.f32.gmra.mxu0 %v336
    %v461 = vpop.f32.mrf.mxu0
    %v462 = vadd.f32 0.0, %v461
    %463 = vmatmul.f32.gmra.mxu0 %v337
    %v464 = vpop.f32.mrf.mxu0
    %v465 = vadd.f32 0.0, %v464
    %466 = vmatmul.f32.gmra.mxu0 %v338
    %v467 = vpop.f32.mrf.mxu0
    %v468 = vadd.f32 0.0, %v467
    %469 = vmatmul.f32.gmra.mxu0 %v339
    %v470 = vpop.f32.mrf.mxu0
    %v471 = vadd.f32 0.0, %v470
    %472 = vmatmul.f32.gmra.mxu0 %v340
    %v473 = vpop.f32.mrf.mxu0
    %v474 = vadd.f32 0.0, %v473
    %475 = vmatmul.f32.gmra.mxu0 %v341
    %v476 = vpop.f32.mrf.mxu0
    %v477 = vadd.f32 0.0, %v476
    %478 = vmatmul.f32.gmra.mxu0 %v342
    %v479 = vpop.f32.mrf.mxu0
    %v480 = vadd.f32 0.0, %v479
    %481 = vmatmul.f32.gmra.mxu0 %v343
    %v482 = vpop.f32.mrf.mxu0
    %v483 = vadd.f32 0.0, %v482
    %484 = vmatmul.f32.gmra.mxu0 %v344
    %v485 = vpop.f32.mrf.mxu0
    %v486 = vadd.f32 0.0, %v485
    %487 = vmatmul.f32.gmra.mxu0 %v345
    %v488 = vpop.f32.mrf.mxu0
    %v489 = vadd.f32 0.0, %v488
    %490 = vmatmul.f32.gmra.mxu0 %v346
    %v491 = vpop.f32.mrf.mxu0
    %v492 = vadd.f32 0.0, %v491
    %493 = vmatmul.f32.gmra.mxu0 %v347
    %v494 = vpop.f32.mrf.mxu0
    %v495 = vadd.f32 0.0, %v494
    %496 = vmatmul.f32.gmra.mxu0 %v348
    %v497 = vpop.f32.mrf.mxu0
    %v498 = vadd.f32 0.0, %v497
    %499 = vmatmul.f32.gmra.mxu0 %v349
    %v500 = vpop.f32.mrf.mxu0
    %v501 = vadd.f32 0.0, %v500
    %502 = vmatmul.f32.gmra.mxu0 %v350
    %v503 = vpop.f32.mrf.mxu0
    %v504 = vadd.f32 0.0, %v503
    %505 = vmatmul.f32.gmra.mxu0 %v351
    %v506 = vpop.f32.mrf.mxu0
    %v507 = vadd.f32 0.0, %v506
    %508 = vmatmul.f32.gmra.mxu0 %v352
    %v509 = vpop.f32.mrf.mxu0
    %v510 = vadd.f32 0.0, %v509
    %511 = vmatmul.f32.gmra.mxu0 %v353
    %v512 = vpop.f32.mrf.mxu0
    %v513 = vadd.f32 0.0, %v512
    %514 = vmatmul.f32.gmra.mxu0 %v354
    %v515 = vpop.f32.mrf.mxu0
    %v516 = vadd.f32 0.0, %v515
    %517 = vmatmul.f32.gmra.mxu0 %v355
    %v518 = vpop.f32.mrf.mxu0
    %v519 = vadd.f32 0.0, %v518
    %520 = vmatmul.f32.gmra.mxu0 %v356
    %v521 = vpop.f32.mrf.mxu0
    %v522 = vadd.f32 0.0, %v521
    %523 = vmatmul.f32.gmra.mxu0 %v357
    %v524 = vpop.f32.mrf.mxu0
    %v525 = vadd.f32 0.0, %v524
    %526 = vmatmul.f32.gmra.mxu0 %v358
    %v527 = vpop.f32.mrf.mxu0
    %v528 = vadd.f32 0.0, %v527
    %529 = vmatmul.f32.gmra.mxu0 %v359
    %v530 = vpop.f32.mrf.mxu0
    %v531 = vadd.f32 0.0, %v530
    %532 = vmatmul.f32.gmra.mxu0 %v360
    %v533 = vpop.f32.mrf.mxu0
    %v534 = vadd.f32 0.0, %v533
    %535 = vmatmul.f32.gmra.mxu0 %v361
    %v536 = vpop.f32.mrf.mxu0
    %v537 = vadd.f32 0.0, %v536
    %538 = vdwg.mxu0
    %vm587 = vcmask 1046528
    %v588 = vrot.slane %v396, 1
    %v589 = vrot.slane %v399, 1
    %v590 = vsel %vm587, %v588, %v589
    %v591 = vrot.slane %v402, 1
    %v592 = vsel %vm587, %v589, %v591
    %v593 = vrot.slane %v405, 1
    %v594 = vrot.slane %v408, 1
    %v595 = vsel %vm587, %v593, %v594
    %v596 = vrot.slane %v411, 1
    %v597 = vsel %vm587, %v594, %v596
    %v598 = vrot.slane %v414, 1
    %v599 = vrot.slane %v417, 1
    %v600 = vsel %vm587, %v598, %v599
    %v601 = vrot.slane %v420, 1
    %v602 = vsel %vm587, %v599, %v601
    %v603 = vrot.slane %v423, 1
    %v604 = vrot.slane %v426, 1
    %v605 = vsel %vm587, %v603, %v604
    %v606 = vrot.slane %v429, 1
    %v607 = vsel %vm587, %v604, %v606
    %v608 = vrot.slane %v432, 1
    %v609 = vrot.slane %v435, 1
    %v610 = vsel %vm587, %v608, %v609
    %v611 = vrot.slane %v438, 1
    %v612 = vsel %vm587, %v609, %v611
    %v613 = vrot.slane %v441, 1
    %v614 = vrot.slane %v444, 1
    %v615 = vsel %vm587, %v613, %v614
    %v616 = vrot.slane %v447, 1
    %v617 = vsel %vm587, %v614, %v616
    %v618 = vrot.slane %v450, 1
    %v619 = vrot.slane %v453, 1
    %v620 = vsel %vm587, %v618, %v619
    %v621 = vrot.slane %v456, 1
    %v622 = vsel %vm587, %v619, %v621
    %v623 = vrot.slane %v459, 1
    %v624 = vrot.slane %v462, 1
    %v625 = vsel %vm587, %v623, %v624
    %v626 = vrot.slane %v465, 1
    %v627 = vsel %vm587, %v624, %v626
    %v628 = vrot.slane %v468, 1
    %v629 = vrot.slane %v471, 1
    %v630 = vsel %vm587, %v628, %v629
    %v631 = vrot.slane %v474, 1
    %v632 = vsel %vm587, %v629, %v631
    %v633 = vrot.slane %v477, 1
    %v634 = vrot.slane %v480, 1
    %v635 = vsel %vm587, %v633, %v634
    %v636 = vrot.slane %v483, 1
    %v637 = vsel %vm587, %v634, %v636
    %v638 = vrot.slane %v486, 1
    %v639 = vrot.slane %v489, 1
    %v640 = vsel %vm587, %v638, %v639
    %v641 = vrot.slane %v492, 1
    %v642 = vsel %vm587, %v639, %v641
    %v643 = vrot.slane %v495, 1
    %v644 = vrot.slane %v498, 1
    %v645 = vsel %vm587, %v643, %v644
    %v646 = vrot.slane %v501, 1
    %v647 = vsel %vm587, %v644, %v646
    %v648 = vrot.slane %v504, 1
    %v649 = vrot.slane %v507, 1
    %v650 = vsel %vm587, %v648, %v649
    %v651 = vrot.slane %v510, 1
    %v652 = vsel %vm587, %v649, %v651
    %v653 = vrot.slane %v513, 1
    %v654 = vrot.slane %v516, 1
    %v655 = vsel %vm587, %v653, %v654
    %v656 = vrot.slane %v519, 1
    %v657 = vsel %vm587, %v654, %v656
    %v658 = vrot.slane %v522, 1
    %v659 = vrot.slane %v525, 1
    %v660 = vsel %vm587, %v658, %v659
    %v661 = vrot.slane %v528, 1
    %v662 = vsel %vm587, %v659, %v661
    %v663 = vrot.slane %v531, 1
    %v664 = vrot.slane %v534, 1
    %v665 = vsel %vm587, %v663, %v664
    %v666 = vrot.slane %v537, 1
    %v667 = vsel %vm587, %v664, %v666
    %668 = vrot.lane.b32.xlu0 %v590, 32
    %v669 = vpop.permute.xlu0 %668
    %670 = vrot.lane.b32.xlu0 %v592, 32
    %v671 = vpop.permute.xlu0 %670
    %672 = vrot.lane.b32.xlu0 %v595, 32
    %v673 = vpop.permute.xlu0 %672
    %674 = vrot.lane.b32.xlu0 %v597, 32
    %v675 = vpop.permute.xlu0 %674
    %676 = vrot.lane.b32.xlu0 %v600, 32
    %v677 = vpop.permute.xlu0 %676
    %678 = vrot.lane.b32.xlu0 %v602, 32
    %v679 = vpop.permute.xlu0 %678
    %680 = vrot.lane.b32.xlu0 %v605, 32
    %v681 = vpop.permute.xlu0 %680
    %682 = vrot.lane.b32.xlu0 %v607, 32
    %v683 = vpop.permute.xlu0 %682
    %684 = vrot.lane.b32.xlu0 %v610, 32
    %v685 = vpop.permute.xlu0 %684
    %686 = vrot.lane.b32.xlu0 %v612, 32
    %v687 = vpop.permute.xlu0 %686
    %688 = vrot.lane.b32.xlu0 %v615, 32
    %v689 = vpop.permute.xlu0 %688
    %690 = vrot.lane.b32.xlu0 %v617, 32
    %v691 = vpop.permute.xlu0 %690
    %692 = vrot.lane.b32.xlu0 %v620, 32
    %v693 = vpop.permute.xlu0 %692
    %694 = vrot.lane.b32.xlu0 %v622, 32
    %v695 = vpop.permute.xlu0 %694
    %696 = vrot.lane.b32.xlu0 %v625, 32
    %v697 = vpop.permute.xlu0 %696
    %698 = vrot.lane.b32.xlu0 %v627, 32
    %v699 = vpop.permute.xlu0 %698
    %700 = vrot.lane.b32.xlu0 %v630, 32
    %v701 = vpop.permute.xlu0 %700
    %702 = vrot.lane.b32.xlu0 %v632, 32
    %v703 = vpop.permute.xlu0 %702
    %704 = vrot.lane.b32.xlu0 %v635, 32
    %v705 = vpop.permute.xlu0 %704
    %706 = vrot.lane.b32.xlu0 %v637, 32
    %v707 = vpop.permute.xlu0 %706
    %708 = vrot.lane.b32.xlu0 %v640, 32
    %v709 = vpop.permute.xlu0 %708
    %710 = vrot.lane.b32.xlu0 %v642, 32
    %v711 = vpop.permute.xlu0 %710
    %712 = vrot.lane.b32.xlu0 %v645, 32
    %v713 = vpop.permute.xlu0 %712
    %714 = vrot.lane.b32.xlu0 %v647, 32
    %v715 = vpop.permute.xlu0 %714
    %716 = vrot.lane.b32.xlu0 %v650, 32
    %v717 = vpop.permute.xlu0 %716
    %718 = vrot.lane.b32.xlu0 %v652, 32
    %v719 = vpop.permute.xlu0 %718
    %720 = vrot.lane.b32.xlu0 %v655, 32
    %v721 = vpop.permute.xlu0 %720
    %722 = vrot.lane.b32.xlu0 %v657, 32
    %v723 = vpop.permute.xlu0 %722
    %724 = vrot.lane.b32.xlu0 %v660, 32
    %v725 = vpop.permute.xlu0 %724
    %726 = vrot.lane.b32.xlu0 %v662, 32
    %v727 = vpop.permute.xlu0 %726
    %728 = vrot.lane.b32.xlu0 %v665, 32
    %v729 = vpop.permute.xlu0 %728
    %730 = vrot.lane.b32.xlu0 %v667, 32
    %v731 = vpop.permute.xlu0 %730
    %vm764 = vcmask 1045504
    %v765 = vrot.slane %v396, 2
    %v766 = vrot.slane %v399, 2
    %v767 = vsel %vm764, %v765, %v766
    %v768 = vrot.slane %v402, 2
    %v769 = vsel %vm764, %v766, %v768
    %v770 = vrot.slane %v405, 2
    %v771 = vrot.slane %v408, 2
    %v772 = vsel %vm764, %v770, %v771
    %v773 = vrot.slane %v411, 2
    %v774 = vsel %vm764, %v771, %v773
    %v775 = vrot.slane %v414, 2
    %v776 = vrot.slane %v417, 2
    %v777 = vsel %vm764, %v775, %v776
    %v778 = vrot.slane %v420, 2
    %v779 = vsel %vm764, %v776, %v778
    %v780 = vrot.slane %v423, 2
    %v781 = vrot.slane %v426, 2
    %v782 = vsel %vm764, %v780, %v781
    %v783 = vrot.slane %v429, 2
    %v784 = vsel %vm764, %v781, %v783
    %v785 = vrot.slane %v432, 2
    %v786 = vrot.slane %v435, 2
    %v787 = vsel %vm764, %v785, %v786
    %v788 = vrot.slane %v438, 2
    %v789 = vsel %vm764, %v786, %v788
    %v790 = vrot.slane %v441, 2
    %v791 = vrot.slane %v444, 2
    %v792 = vsel %vm764, %v790, %v791
    %v793 = vrot.slane %v447, 2
    %v794 = vsel %vm764, %v791, %v793
    %v795 = vrot.slane %v450, 2
    %v796 = vrot.slane %v453, 2
    %v797 = vsel %vm764, %v795, %v796
    %v798 = vrot.slane %v456, 2
    %v799 = vsel %vm764, %v796, %v798
    %v800 = vrot.slane %v459, 2
    %v801 = vrot.slane %v462, 2
    %v802 = vsel %vm764, %v800, %v801
    %v803 = vrot.slane %v465, 2
    %v804 = vsel %vm764, %v801, %v803
    %v805 = vrot.slane %v468, 2
    %v806 = vrot.slane %v471, 2
    %v807 = vsel %vm764, %v805, %v806
    %v808 = vrot.slane %v474, 2
    %v809 = vsel %vm764, %v806, %v808
    %v810 = vrot.slane %v477, 2
    %v811 = vrot.slane %v480, 2
    %v812 = vsel %vm764, %v810, %v811
    %v813 = vrot.slane %v483, 2
    %v814 = vsel %vm764, %v811, %v813
    %v815 = vrot.slane %v486, 2
    %v816 = vrot.slane %v489, 2
    %v817 = vsel %vm764, %v815, %v816
    %v818 = vrot.slane %v492, 2
    %v819 = vsel %vm764, %v816, %v818
    %v820 = vrot.slane %v495, 2
    %v821 = vrot.slane %v498, 2
    %v822 = vsel %vm764, %v820, %v821
    %v823 = vrot.slane %v501, 2
    %v824 = vsel %vm764, %v821, %v823
    %v825 = vrot.slane %v504, 2
    %v826 = vrot.slane %v507, 2
    %v827 = vsel %vm764, %v825, %v826
    %v828 = vrot.slane %v510, 2
    %v829 = vsel %vm764, %v826, %v828
    %v830 = vrot.slane %v513, 2
    %v831 = vrot.slane %v516, 2
    %v832 = vsel %vm764, %v830, %v831
    %v833 = vrot.slane %v519, 2
    %v834 = vsel %vm764, %v831, %v833
    %v835 = vrot.slane %v522, 2
    %v836 = vrot.slane %v525, 2
    %v837 = vsel %vm764, %v835, %v836
    %v838 = vrot.slane %v528, 2
    %v839 = vsel %vm764, %v836, %v838
    %v840 = vrot.slane %v531, 2
    %v841 = vrot.slane %v534, 2
    %v842 = vsel %vm764, %v840, %v841
    %v843 = vrot.slane %v537, 2
    %v844 = vsel %vm764, %v841, %v843
    %845 = vrot.lane.b32.xlu0 %v767, 64
    %v846 = vpop.permute.xlu0 %845
    %847 = vrot.lane.b32.xlu0 %v769, 64
    %v848 = vpop.permute.xlu0 %847
    %849 = vrot.lane.b32.xlu0 %v772, 64
    %v850 = vpop.permute.xlu0 %849
    %851 = vrot.lane.b32.xlu0 %v774, 64
    %v852 = vpop.permute.xlu0 %851
    %853 = vrot.lane.b32.xlu0 %v777, 64
    %v854 = vpop.permute.xlu0 %853
    %855 = vrot.lane.b32.xlu0 %v779, 64
    %v856 = vpop.permute.xlu0 %855
    %857 = vrot.lane.b32.xlu0 %v782, 64
    %v858 = vpop.permute.xlu0 %857
    %859 = vrot.lane.b32.xlu0 %v784, 64
    %v860 = vpop.permute.xlu0 %859
    %861 = vrot.lane.b32.xlu0 %v787, 64
    %v862 = vpop.permute.xlu0 %861
    %863 = vrot.lane.b32.xlu0 %v789, 64
    %v864 = vpop.permute.xlu0 %863
    %865 = vrot.lane.b32.xlu0 %v792, 64
    %v866 = vpop.permute.xlu0 %865
    %867 = vrot.lane.b32.xlu0 %v794, 64
    %v868 = vpop.permute.xlu0 %867
    %869 = vrot.lane.b32.xlu0 %v797, 64
    %v870 = vpop.permute.xlu0 %869
    %871 = vrot.lane.b32.xlu0 %v799, 64
    %v872 = vpop.permute.xlu0 %871
    %873 = vrot.lane.b32.xlu0 %v802, 64
    %v874 = vpop.permute.xlu0 %873
    %875 = vrot.lane.b32.xlu0 %v804, 64
    %v876 = vpop.permute.xlu0 %875
    %877 = vrot.lane.b32.xlu0 %v807, 64
    %v878 = vpop.permute.xlu0 %877
    %879 = vrot.lane.b32.xlu0 %v809, 64
    %v880 = vpop.permute.xlu0 %879
    %881 = vrot.lane.b32.xlu0 %v812, 64
    %v882 = vpop.permute.xlu0 %881
    %883 = vrot.lane.b32.xlu0 %v814, 64
    %v884 = vpop.permute.xlu0 %883
    %885 = vrot.lane.b32.xlu0 %v817, 64
    %v886 = vpop.permute.xlu0 %885
    %887 = vrot.lane.b32.xlu0 %v819, 64
    %v888 = vpop.permute.xlu0 %887
    %889 = vrot.lane.b32.xlu0 %v822, 64
    %v890 = vpop.permute.xlu0 %889
    %891 = vrot.lane.b32.xlu0 %v824, 64
    %v892 = vpop.permute.xlu0 %891
    %893 = vrot.lane.b32.xlu0 %v827, 64
    %v894 = vpop.permute.xlu0 %893
    %895 = vrot.lane.b32.xlu0 %v829, 64
    %v896 = vpop.permute.xlu0 %895
    %897 = vrot.lane.b32.xlu0 %v832, 64
    %v898 = vpop.permute.xlu0 %897
    %899 = vrot.lane.b32.xlu0 %v834, 64
    %v900 = vpop.permute.xlu0 %899
    %901 = vrot.lane.b32.xlu0 %v837, 64
    %v902 = vpop.permute.xlu0 %901
    %903 = vrot.lane.b32.xlu0 %v839, 64
    %v904 = vpop.permute.xlu0 %903
    %905 = vrot.lane.b32.xlu0 %v842, 64
    %v906 = vpop.permute.xlu0 %905
    %907 = vrot.lane.b32.xlu0 %v844, 64
    %v908 = vpop.permute.xlu0 %907
    %vm941 = vcmask 1044480
    %v942 = vrot.slane %v396, 3
    %v943 = vrot.slane %v399, 3
    %v944 = vsel %vm941, %v942, %v943
    %v945 = vrot.slane %v402, 3
    %v946 = vsel %vm941, %v943, %v945
    %v947 = vrot.slane %v405, 3
    %v948 = vrot.slane %v408, 3
    %v949 = vsel %vm941, %v947, %v948
    %v950 = vrot.slane %v411, 3
    %v951 = vsel %vm941, %v948, %v950
    %v952 = vrot.slane %v414, 3
    %v953 = vrot.slane %v417, 3
    %v954 = vsel %vm941, %v952, %v953
    %v955 = vrot.slane %v420, 3
    %v956 = vsel %vm941, %v953, %v955
    %v957 = vrot.slane %v423, 3
    %v958 = vrot.slane %v426, 3
    %v959 = vsel %vm941, %v957, %v958
    %v960 = vrot.slane %v429, 3
    %v961 = vsel %vm941, %v958, %v960
    %v962 = vrot.slane %v432, 3
    %v963 = vrot.slane %v435, 3
    %v964 = vsel %vm941, %v962, %v963
    %v965 = vrot.slane %v438, 3
    %v966 = vsel %vm941, %v963, %v965
    %v967 = vrot.slane %v441, 3
    %v968 = vrot.slane %v444, 3
    %v969 = vsel %vm941, %v967, %v968
    %v970 = vrot.slane %v447, 3
    %v971 = vsel %vm941, %v968, %v970
    %v972 = vrot.slane %v450, 3
    %v973 = vrot.slane %v453, 3
    %v974 = vsel %vm941, %v972, %v973
    %v975 = vrot.slane %v456, 3
    %v976 = vsel %vm941, %v973, %v975
    %v977 = vrot.slane %v459, 3
    %v978 = vrot.slane %v462, 3
    %v979 = vsel %vm941, %v977, %v978
    %v980 = vrot.slane %v465, 3
    %v981 = vsel %vm941, %v978, %v980
    %v982 = vrot.slane %v468, 3
    %v983 = vrot.slane %v471, 3
    %v984 = vsel %vm941, %v982, %v983
    %v985 = vrot.slane %v474, 3
    %v986 = vsel %vm941, %v983, %v985
    %v987 = vrot.slane %v477, 3
    %v988 = vrot.slane %v480, 3
    %v989 = vsel %vm941, %v987, %v988
    %v990 = vrot.slane %v483, 3
    %v991 = vsel %vm941, %v988, %v990
    %v992 = vrot.slane %v486, 3
    %v993 = vrot.slane %v489, 3
    %v994 = vsel %vm941, %v992, %v993
    %v995 = vrot.slane %v492, 3
    %v996 = vsel %vm941, %v993, %v995
    %v997 = vrot.slane %v495, 3
    %v998 = vrot.slane %v498, 3
    %v999 = vsel %vm941, %v997, %v998
    %v1000 = vrot.slane %v501, 3
    %v1001 = vsel %vm941, %v998, %v1000
    %v1002 = vrot.slane %v504, 3
    %v1003 = vrot.slane %v507, 3
    %v1004 = vsel %vm941, %v1002, %v1003
    %v1005 = vrot.slane %v510, 3
    %v1006 = vsel %vm941, %v1003, %v1005
    %v1007 = vrot.slane %v513, 3
    %v1008 = vrot.slane %v516, 3
    %v1009 = vsel %vm941, %v1007, %v1008
    %v1010 = vrot.slane %v519, 3
    %v1011 = vsel %vm941, %v1008, %v1010
    %v1012 = vrot.slane %v522, 3
    %v1013 = vrot.slane %v525, 3
    %v1014 = vsel %vm941, %v1012, %v1013
    %v1015 = vrot.slane %v528, 3
    %v1016 = vsel %vm941, %v1013, %v1015
    %v1017 = vrot.slane %v531, 3
    %v1018 = vrot.slane %v534, 3
    %v1019 = vsel %vm941, %v1017, %v1018
    %v1020 = vrot.slane %v537, 3
    %v1021 = vsel %vm941, %v1018, %v1020
    %1022 = vrot.lane.b32.xlu0 %v944, 96
    %v1023 = vpop.permute.xlu0 %1022
    %1024 = vrot.lane.b32.xlu0 %v946, 96
    %v1025 = vpop.permute.xlu0 %1024
    %1026 = vrot.lane.b32.xlu0 %v949, 96
    %v1027 = vpop.permute.xlu0 %1026
    %1028 = vrot.lane.b32.xlu0 %v951, 96
    %v1029 = vpop.permute.xlu0 %1028
    %1030 = vrot.lane.b32.xlu0 %v954, 96
    %v1031 = vpop.permute.xlu0 %1030
    %1032 = vrot.lane.b32.xlu0 %v956, 96
    %v1033 = vpop.permute.xlu0 %1032
    %1034 = vrot.lane.b32.xlu0 %v959, 96
    %v1035 = vpop.permute.xlu0 %1034
    %1036 = vrot.lane.b32.xlu0 %v961, 96
    %v1037 = vpop.permute.xlu0 %1036
    %1038 = vrot.lane.b32.xlu0 %v964, 96
    %v1039 = vpop.permute.xlu0 %1038
    %1040 = vrot.lane.b32.xlu0 %v966, 96
    %v1041 = vpop.permute.xlu0 %1040
    %1042 = vrot.lane.b32.xlu0 %v969, 96
    %v1043 = vpop.permute.xlu0 %1042
    %1044 = vrot.lane.b32.xlu0 %v971, 96
    %v1045 = vpop.permute.xlu0 %1044
    %1046 = vrot.lane.b32.xlu0 %v974, 96
    %v1047 = vpop.permute.xlu0 %1046
    %1048 = vrot.lane.b32.xlu0 %v976, 96
    %v1049 = vpop.permute.xlu0 %1048
    %1050 = vrot.lane.b32.xlu0 %v979, 96
    %v1051 = vpop.permute.xlu0 %1050
    %1052 = vrot.lane.b32.xlu0 %v981, 96
    %v1053 = vpop.permute.xlu0 %1052
    %1054 = vrot.lane.b32.xlu0 %v984, 96
    %v1055 = vpop.permute.xlu0 %1054
    %1056 = vrot.lane.b32.xlu0 %v986, 96
    %v1057 = vpop.permute.xlu0 %1056
    %1058 = vrot.lane.b32.xlu0 %v989, 96
    %v1059 = vpop.permute.xlu0 %1058
    %1060 = vrot.lane.b32.xlu0 %v991, 96
    %v1061 = vpop.permute.xlu0 %1060
    %1062 = vrot.lane.b32.xlu0 %v994, 96
    %v1063 = vpop.permute.xlu0 %1062
    %1064 = vrot.lane.b32.xlu0 %v996, 96
    %v1065 = vpop.permute.xlu0 %1064
    %1066 = vrot.lane.b32.xlu0 %v999, 96
    %v1067 = vpop.permute.xlu0 %1066
    %1068 = vrot.lane.b32.xlu0 %v1001, 96
    %v1069 = vpop.permute.xlu0 %1068
    %1070 = vrot.lane.b32.xlu0 %v1004, 96
    %v1071 = vpop.permute.xlu0 %1070
    %1072 = vrot.lane.b32.xlu0 %v1006, 96
    %v1073 = vpop.permute.xlu0 %1072
    %1074 = vrot.lane.b32.xlu0 %v1009, 96
    %v1075 = vpop.permute.xlu0 %1074
    %1076 = vrot.lane.b32.xlu0 %v1011, 96
    %v1077 = vpop.permute.xlu0 %1076
    %1078 = vrot.lane.b32.xlu0 %v1014, 96
    %v1079 = vpop.permute.xlu0 %1078
    %1080 = vrot.lane.b32.xlu0 %v1016, 96
    %v1081 = vpop.permute.xlu0 %1080
    %1082 = vrot.lane.b32.xlu0 %v1019, 96
    %v1083 = vpop.permute.xlu0 %1082
    %1084 = vrot.lane.b32.xlu0 %v1021, 96
    %v1085 = vpop.permute.xlu0 %1084
    %vm1118 = vcmask 1043456
    %v1119 = vrot.slane %v396, 4
    %v1120 = vrot.slane %v399, 4
    %v1121 = vsel %vm1118, %v1119, %v1120
    %v1122 = vrot.slane %v402, 4
    %v1123 = vsel %vm1118, %v1120, %v1122
    %v1124 = vrot.slane %v405, 4
    %v1125 = vrot.slane %v408, 4
    %v1126 = vsel %vm1118, %v1124, %v1125
    %v1127 = vrot.slane %v411, 4
    %v1128 = vsel %vm1118, %v1125, %v1127
    %v1129 = vrot.slane %v414, 4
    %v1130 = vrot.slane %v417, 4
    %v1131 = vsel %vm1118, %v1129, %v1130
    %v1132 = vrot.slane %v420, 4
    %v1133 = vsel %vm1118, %v1130, %v1132
    %v1134 = vrot.slane %v423, 4
    %v1135 = vrot.slane %v426, 4
    %v1136 = vsel %vm1118, %v1134, %v1135
    %v1137 = vrot.slane %v429, 4
    %v1138 = vsel %vm1118, %v1135, %v1137
    %v1139 = vrot.slane %v432, 4
    %v1140 = vrot.slane %v435, 4
    %v1141 = vsel %vm1118, %v1139, %v1140
    %v1142 = vrot.slane %v438, 4
    %v1143 = vsel %vm1118, %v1140, %v1142
    %v1144 = vrot.slane %v441, 4
    %v1145 = vrot.slane %v444, 4
    %v1146 = vsel %vm1118, %v1144, %v1145
    %v1147 = vrot.slane %v447, 4
    %v1148 = vsel %vm1118, %v1145, %v1147
    %v1149 = vrot.slane %v450, 4
    %v1150 = vrot.slane %v453, 4
    %v1151 = vsel %vm1118, %v1149, %v1150
    %v1152 = vrot.slane %v456, 4
    %v1153 = vsel %vm1118, %v1150, %v1152
    %v1154 = vrot.slane %v459, 4
    %v1155 = vrot.slane %v462, 4
    %v1156 = vsel %vm1118, %v1154, %v1155
    %v1157 = vrot.slane %v465, 4
    %v1158 = vsel %vm1118, %v1155, %v1157
    %v1159 = vrot.slane %v468, 4
    %v1160 = vrot.slane %v471, 4
    %v1161 = vsel %vm1118, %v1159, %v1160
    %v1162 = vrot.slane %v474, 4
    %v1163 = vsel %vm1118, %v1160, %v1162
    %v1164 = vrot.slane %v477, 4
    %v1165 = vrot.slane %v480, 4
    %v1166 = vsel %vm1118, %v1164, %v1165
    %v1167 = vrot.slane %v483, 4
    %v1168 = vsel %vm1118, %v1165, %v1167
    %v1169 = vrot.slane %v486, 4
    %v1170 = vrot.slane %v489, 4
    %v1171 = vsel %vm1118, %v1169, %v1170
    %v1172 = vrot.slane %v492, 4
    %v1173 = vsel %vm1118, %v1170, %v1172
    %v1174 = vrot.slane %v495, 4
    %v1175 = vrot.slane %v498, 4
    %v1176 = vsel %vm1118, %v1174, %v1175
    %v1177 = vrot.slane %v501, 4
    %v1178 = vsel %vm1118, %v1175, %v1177
    %v1179 = vrot.slane %v504, 4
    %v1180 = vrot.slane %v507, 4
    %v1181 = vsel %vm1118, %v1179, %v1180
    %v1182 = vrot.slane %v510, 4
    %v1183 = vsel %vm1118, %v1180, %v1182
    %v1184 = vrot.slane %v513, 4
    %v1185 = vrot.slane %v516, 4
    %v1186 = vsel %vm1118, %v1184, %v1185
    %v1187 = vrot.slane %v519, 4
    %v1188 = vsel %vm1118, %v1185, %v1187
    %v1189 = vrot.slane %v522, 4
    %v1190 = vrot.slane %v525, 4
    %v1191 = vsel %vm1118, %v1189, %v1190
    %v1192 = vrot.slane %v528, 4
    %v1193 = vsel %vm1118, %v1190, %v1192
    %v1194 = vrot.slane %v531, 4
    %v1195 = vrot.slane %v534, 4
    %v1196 = vsel %vm1118, %v1194, %v1195
    %v1197 = vrot.slane %v537, 4
    %v1198 = vsel %vm1118, %v1195, %v1197
    %vm1199 = vcmask 261120
    %v1200 = vsel %vm1199, %v396, %v669
    %v1201 = vsel %vm1199, %v399, %v671
    %v1202 = vsel %vm1199, %v405, %v673
    %v1203 = vsel %vm1199, %v408, %v675
    %v1204 = vsel %vm1199, %v414, %v677
    %v1205 = vsel %vm1199, %v417, %v679
    %v1206 = vsel %vm1199, %v423, %v681
    %v1207 = vsel %vm1199, %v426, %v683
    %v1208 = vsel %vm1199, %v432, %v685
    %v1209 = vsel %vm1199, %v435, %v687
    %v1210 = vsel %vm1199, %v441, %v689
    %v1211 = vsel %vm1199, %v444, %v691
    %v1212 = vsel %vm1199, %v450, %v693
    %v1213 = vsel %vm1199, %v453, %v695
    %v1214 = vsel %vm1199, %v459, %v697
    %v1215 = vsel %vm1199, %v462, %v699
    %v1216 = vsel %vm1199, %v468, %v701
    %v1217 = vsel %vm1199, %v471, %v703
    %v1218 = vsel %vm1199, %v477, %v705
    %v1219 = vsel %vm1199, %v480, %v707
    %v1220 = vsel %vm1199, %v486, %v709
    %v1221 = vsel %vm1199, %v489, %v711
    %v1222 = vsel %vm1199, %v495, %v713
    %v1223 = vsel %vm1199, %v498, %v715
    %v1224 = vsel %vm1199, %v504, %v717
    %v1225 = vsel %vm1199, %v507, %v719
    %v1226 = vsel %vm1199, %v513, %v721
    %v1227 = vsel %vm1199, %v516, %v723
    %v1228 = vsel %vm1199, %v522, %v725
    %v1229 = vsel %vm1199, %v525, %v727
    %v1230 = vsel %vm1199, %v531, %v729
    %v1231 = vsel %vm1199, %v534, %v731
    %vm1232 = vcmask 523264
    %v1233 = vsel %vm1232, %v1200, %v846
    %v1234 = vsel %vm1232, %v1201, %v848
    %v1235 = vsel %vm1232, %v1202, %v850
    %v1236 = vsel %vm1232, %v1203, %v852
    %v1237 = vsel %vm1232, %v1204, %v854
    %v1238 = vsel %vm1232, %v1205, %v856
    %v1239 = vsel %vm1232, %v1206, %v858
    %v1240 = vsel %vm1232, %v1207, %v860
    %v1241 = vsel %vm1232, %v1208, %v862
    %v1242 = vsel %vm1232, %v1209, %v864
    %v1243 = vsel %vm1232, %v1210, %v866
    %v1244 = vsel %vm1232, %v1211, %v868
    %v1245 = vsel %vm1232, %v1212, %v870
    %v1246 = vsel %vm1232, %v1213, %v872
    %v1247 = vsel %vm1232, %v1214, %v874
    %v1248 = vsel %vm1232, %v1215, %v876
    %v1249 = vsel %vm1232, %v1216, %v878
    %v1250 = vsel %vm1232, %v1217, %v880
    %v1251 = vsel %vm1232, %v1218, %v882
    %v1252 = vsel %vm1232, %v1219, %v884
    %v1253 = vsel %vm1232, %v1220, %v886
    %v1254 = vsel %vm1232, %v1221, %v888
    %v1255 = vsel %vm1232, %v1222, %v890
    %v1256 = vsel %vm1232, %v1223, %v892
    %v1257 = vsel %vm1232, %v1224, %v894
    %v1258 = vsel %vm1232, %v1225, %v896
    %v1259 = vsel %vm1232, %v1226, %v898
    %v1260 = vsel %vm1232, %v1227, %v900
    %v1261 = vsel %vm1232, %v1228, %v902
    %v1262 = vsel %vm1232, %v1229, %v904
    %v1263 = vsel %vm1232, %v1230, %v906
    %v1264 = vsel %vm1232, %v1231, %v908
    %vm1265 = vcmask 785408
    %v1266 = vsel %vm1265, %v1233, %v1023
    %v1267 = vsel %vm1265, %v1234, %v1025
    %v1268 = vsel %vm1265, %v1235, %v1027
    %v1269 = vsel %vm1265, %v1236, %v1029
    %v1270 = vsel %vm1265, %v1237, %v1031
    %v1271 = vsel %vm1265, %v1238, %v1033
    %v1272 = vsel %vm1265, %v1239, %v1035
    %v1273 = vsel %vm1265, %v1240, %v1037
    %v1274 = vsel %vm1265, %v1241, %v1039
    %v1275 = vsel %vm1265, %v1242, %v1041
    %v1276 = vsel %vm1265, %v1243, %v1043
    %v1277 = vsel %vm1265, %v1244, %v1045
    %v1278 = vsel %vm1265, %v1245, %v1047
    %v1279 = vsel %vm1265, %v1246, %v1049
    %v1280 = vsel %vm1265, %v1247, %v1051
    %v1281 = vsel %vm1265, %v1248, %v1053
    %v1282 = vsel %vm1265, %v1249, %v1055
    %v1283 = vsel %vm1265, %v1250, %v1057
    %v1284 = vsel %vm1265, %v1251, %v1059
    %v1285 = vsel %vm1265, %v1252, %v1061
    %v1286 = vsel %vm1265, %v1253, %v1063
    %v1287 = vsel %vm1265, %v1254, %v1065
    %v1288 = vsel %vm1265, %v1255, %v1067
    %v1289 = vsel %vm1265, %v1256, %v1069
    %v1290 = vsel %vm1265, %v1257, %v1071
    %v1291 = vsel %vm1265, %v1258, %v1073
    %v1292 = vsel %vm1265, %v1259, %v1075
    %v1293 = vsel %vm1265, %v1260, %v1077
    %v1294 = vsel %vm1265, %v1261, %v1079
    %v1295 = vsel %vm1265, %v1262, %v1081
    %v1296 = vsel %vm1265, %v1263, %v1083
    %v1297 = vsel %vm1265, %v1264, %v1085
    %v1298 = vld [vmem:[%s2] sm:$0xff]
    %v1299 = vld [vmem:[%s2 + $0x8] sm:$0xff]
    %v1300 = vld [vmem:[%s2 + $0x10] sm:$0xff]
    %v1301 = vld [vmem:[%s2 + $0x18] sm:$0xff]
    %v1302 = vld [vmem:[%s2 + $0x20] sm:$0xff]
    %v1303 = vld [vmem:[%s2 + $0x28] sm:$0xff]
    %v1304 = vld [vmem:[%s2 + $0x30] sm:$0xff]
    %v1305 = vld [vmem:[%s2 + $0x38] sm:$0xff]
    %v1306 = vld [vmem:[%s2 + $0x40] sm:$0xff]
    %v1307 = vld [vmem:[%s2 + $0x48] sm:$0xff]
    %v1308 = vld [vmem:[%s2 + $0x50] sm:$0xff]
    %v1309 = vld [vmem:[%s2 + $0x58] sm:$0xff]
    %v1310 = vld [vmem:[%s2 + $0x60] sm:$0xff]
    %v1311 = vld [vmem:[%s2 + $0x68] sm:$0xff]
    %v1312 = vld [vmem:[%s2 + $0x70] sm:$0xff]
    %v1313 = vld [vmem:[%s2 + $0x78] sm:$0xff]
    %v1314 = vld [vmem:[%s2 + $0x80] sm:$0xff]
    %v1315 = vld [vmem:[%s2 + $0x88] sm:$0xff]
    %v1316 = vld [vmem:[%s2 + $0x90] sm:$0xff]
    %v1317 = vld [vmem:[%s2 + $0x98] sm:$0xff]
    %v1318 = vsel %vm1199, %v1121, 0
    %v1320 = vsel %vm1199, %v1123, 0
    %v1322 = vsel %vm1199, %v1126, 0
    %v1324 = vsel %vm1199, %v1128, 0
    %v1326 = vsel %vm1199, %v1131, 0
    %v1328 = vsel %vm1199, %v1133, 0
    %v1330 = vsel %vm1199, %v1136, 0
    %v1332 = vsel %vm1199, %v1138, 0
    %v1334 = vsel %vm1199, %v1141, 0
    %v1336 = vsel %vm1199, %v1143, 0
    %v1338 = vsel %vm1199, %v1146, 0
    %v1340 = vsel %vm1199, %v1148, 0
    %v1342 = vsel %vm1199, %v1151, 0
    %v1344 = vsel %vm1199, %v1153, 0
    %v1346 = vsel %vm1199, %v1156, 0
    %v1348 = vsel %vm1199, %v1158, 0
    %v1350 = vsel %vm1199, %v1161, 0
    %v1352 = vsel %vm1199, %v1163, 0
    %v1354 = vsel %vm1199, %v1166, 0
    %v1356 = vsel %vm1199, %v1168, 0
    %v1358 = vsel %vm1199, %v1171, 0
    %v1360 = vsel %vm1199, %v1173, 0
    %v1362 = vsel %vm1199, %v1176, 0
    %v1364 = vsel %vm1199, %v1178, 0
    %v1366 = vsel %vm1199, %v1181, 0
    %v1368 = vsel %vm1199, %v1183, 0
    %v1370 = vsel %vm1199, %v1186, 0
    %v1372 = vsel %vm1199, %v1188, 0
    %v1374 = vsel %vm1199, %v1191, 0
    %v1376 = vsel %vm1199, %v1193, 0
    %v1378 = vsel %vm1199, %v1196, 0
    %v1380 = vsel %vm1199, %v1198, 0
    %1382 = vmatpush.msra.mxu0 %v1313
    %1383 = vmatpush.msra.mxu0 %v1312
    %1384 = vmatpush.msra.mxu0 %v1311
    %1385 = vmatpush.msra.mxu0 %v1310
    %1386 = vmatpush.msra.mxu0 %v1309
    %1387 = vmatpush.msra.mxu0 %v1308
    %1388 = vmatpush.msra.mxu0 %v1307
    %1389 = vmatpush.msra.mxu0 %v1306
    %1390 = vmatpush.msra.mxu0 %v1305
    %1391 = vmatpush.msra.mxu0 %v1304
    %1392 = vmatpush.msra.mxu0 %v1303
    %1393 = vmatpush.msra.mxu0 %v1302
    %1394 = vmatpush.msra.mxu0 %v1301
    %1395 = vmatpush.msra.mxu0 %v1300
    %1396 = vmatpush.msra.mxu0 %v1299
    %1397 = vmatpush.msra.mxu0 %v1298
    %1398 = vmatmul.f32.gmra.mxu0 %v1266
    %v1399 = vpop.f32.mrf.mxu0
    %v1400 = vadd.f32 0.0, %v1399
    %1401 = vmatmul.f32.gmra.mxu0 %v1267
    %v1402 = vpop.f32.mrf.mxu0
    %v1403 = vadd.f32 0.0, %v1402
    %1404 = vmatmul.f32.gmra.mxu0 %v1268
    %v1405 = vpop.f32.mrf.mxu0
    %v1406 = vadd.f32 0.0, %v1405
    %1407 = vmatmul.f32.gmra.mxu0 %v1269
    %v1408 = vpop.f32.mrf.mxu0
    %v1409 = vadd.f32 0.0, %v1408
    %1410 = vmatmul.f32.gmra.mxu0 %v1270
    %v1411 = vpop.f32.mrf.mxu0
    %v1412 = vadd.f32 0.0, %v1411
    %1413 = vmatmul.f32.gmra.mxu0 %v1271
    %v1414 = vpop.f32.mrf.mxu0
    %v1415 = vadd.f32 0.0, %v1414
    %1416 = vmatmul.f32.gmra.mxu0 %v1272
    %v1417 = vpop.f32.mrf.mxu0
    %v1418 = vadd.f32 0.0, %v1417
    %1419 = vmatmul.f32.gmra.mxu0 %v1273
    %v1420 = vpop.f32.mrf.mxu0
    %v1421 = vadd.f32 0.0, %v1420
    %1422 = vmatmul.f32.gmra.mxu0 %v1274
    %v1423 = vpop.f32.mrf.mxu0
    %v1424 = vadd.f32 0.0, %v1423
    %1425 = vmatmul.f32.gmra.mxu0 %v1275
    %v1426 = vpop.f32.mrf.mxu0
    %v1427 = vadd.f32 0.0, %v1426
    %1428 = vmatmul.f32.gmra.mxu0 %v1276
    %v1429 = vpop.f32.mrf.mxu0
    %v1430 = vadd.f32 0.0, %v1429
    %1431 = vmatmul.f32.gmra.mxu0 %v1277
    %v1432 = vpop.f32.mrf.mxu0
    %v1433 = vadd.f32 0.0, %v1432
    %1434 = vmatmul.f32.gmra.mxu0 %v1278
    %v1435 = vpop.f32.mrf.mxu0
    %v1436 = vadd.f32 0.0, %v1435
    %1437 = vmatmul.f32.gmra.mxu0 %v1279
    %v1438 = vpop.f32.mrf.mxu0
    %v1439 = vadd.f32 0.0, %v1438
    %1440 = vmatmul.f32.gmra.mxu0 %v1280
    %v1441 = vpop.f32.mrf.mxu0
    %v1442 = vadd.f32 0.0, %v1441
    %1443 = vmatmul.f32.gmra.mxu0 %v1281
    %v1444 = vpop.f32.mrf.mxu0
    %v1445 = vadd.f32 0.0, %v1444
    %1446 = vmatmul.f32.gmra.mxu0 %v1282
    %v1447 = vpop.f32.mrf.mxu0
    %v1448 = vadd.f32 0.0, %v1447
    %1449 = vmatmul.f32.gmra.mxu0 %v1283
    %v1450 = vpop.f32.mrf.mxu0
    %v1451 = vadd.f32 0.0, %v1450
    %1452 = vmatmul.f32.gmra.mxu0 %v1284
    %v1453 = vpop.f32.mrf.mxu0
    %v1454 = vadd.f32 0.0, %v1453
    %1455 = vmatmul.f32.gmra.mxu0 %v1285
    %v1456 = vpop.f32.mrf.mxu0
    %v1457 = vadd.f32 0.0, %v1456
    %1458 = vmatmul.f32.gmra.mxu0 %v1286
    %v1459 = vpop.f32.mrf.mxu0
    %v1460 = vadd.f32 0.0, %v1459
    %1461 = vmatmul.f32.gmra.mxu0 %v1287
    %v1462 = vpop.f32.mrf.mxu0
    %v1463 = vadd.f32 0.0, %v1462
    %1464 = vmatmul.f32.gmra.mxu0 %v1288
    %v1465 = vpop.f32.mrf.mxu0
    %v1466 = vadd.f32 0.0, %v1465
    %1467 = vmatmul.f32.gmra.mxu0 %v1289
    %v1468 = vpop.f32.mrf.mxu0
    %v1469 = vadd.f32 0.0, %v1468
    %1470 = vmatmul.f32.gmra.mxu0 %v1290
    %v1471 = vpop.f32.mrf.mxu0
    %v1472 = vadd.f32 0.0, %v1471
    %1473 = vmatmul.f32.gmra.mxu0 %v1291
    %v1474 = vpop.f32.mrf.mxu0
    %v1475 = vadd.f32 0.0, %v1474
    %1476 = vmatmul.f32.gmra.mxu0 %v1292
    %v1477 = vpop.f32.mrf.mxu0
    %v1478 = vadd.f32 0.0, %v1477
    %1479 = vmatmul.f32.gmra.mxu0 %v1293
    %v1480 = vpop.f32.mrf.mxu0
    %v1481 = vadd.f32 0.0, %v1480
    %1482 = vmatmul.f32.gmra.mxu0 %v1294
    %v1483 = vpop.f32.mrf.mxu0
    %v1484 = vadd.f32 0.0, %v1483
    %1485 = vmatmul.f32.gmra.mxu0 %v1295
    %v1486 = vpop.f32.mrf.mxu0
    %v1487 = vadd.f32 0.0, %v1486
    %1488 = vmatmul.f32.gmra.mxu0 %v1296
    %v1489 = vpop.f32.mrf.mxu0
    %v1490 = vadd.f32 0.0, %v1489
    %1491 = vmatmul.f32.gmra.mxu0 %v1297
    %v1492 = vpop.f32.mrf.mxu0
    %v1493 = vadd.f32 0.0, %v1492
    %1494 = vdwg.mxu0
    %1495 = vmatpush.msra.mxu0 0.0
    %1496 = vmatpush.msra.mxu0 0.0
    %1497 = vmatpush.msra.mxu0 0.0
    %1498 = vmatpush.msra.mxu0 0.0
    %1499 = vmatpush.msra.mxu0 0.0
    %1500 = vmatpush.msra.mxu0 0.0
    %1501 = vmatpush.msra.mxu0 0.0
    %1502 = vmatpush.msra.mxu0 0.0
    %1503 = vmatpush.msra.mxu0 0.0
    %1504 = vmatpush.msra.mxu0 0.0
    %1505 = vmatpush.msra.mxu0 0.0
    %1506 = vmatpush.msra.mxu0 0.0
    %1507 = vmatpush.msra.mxu0 %v1317
    %1508 = vmatpush.msra.mxu0 %v1316
    %1509 = vmatpush.msra.mxu0 %v1315
    %1510 = vmatpush.msra.mxu0 %v1314
    %1511 = vmatmul.f32.gmra.mxu0 %v1318
    %v1512 = vpop.f32.mrf.mxu0
    %v1513 = vadd.f32 %v1400, %v1512
    %1514 = vmatmul.f32.gmra.mxu0 %v1320
    %v1515 = vpop.f32.mrf.mxu0
    %v1516 = vadd.f32 %v1403, %v1515
    %1517 = vmatmul.f32.gmra.mxu0 %v1322
    %v1518 = vpop.f32.mrf.mxu0
    %v1519 = vadd.f32 %v1406, %v1518
    %1520 = vmatmul.f32.gmra.mxu0 %v1324
    %v1521 = vpop.f32.mrf.mxu0
    %v1522 = vadd.f32 %v1409, %v1521
    %1523 = vmatmul.f32.gmra.mxu0 %v1326
    %v1524 = vpop.f32.mrf.mxu0
    %v1525 = vadd.f32 %v1412, %v1524
    %1526 = vmatmul.f32.gmra.mxu0 %v1328
    %v1527 = vpop.f32.mrf.mxu0
    %v1528 = vadd.f32 %v1415, %v1527
    %1529 = vmatmul.f32.gmra.mxu0 %v1330
    %v1530 = vpop.f32.mrf.mxu0
    %v1531 = vadd.f32 %v1418, %v1530
    %1532 = vmatmul.f32.gmra.mxu0 %v1332
    %v1533 = vpop.f32.mrf.mxu0
    %v1534 = vadd.f32 %v1421, %v1533
    %1535 = vmatmul.f32.gmra.mxu0 %v1334
    %v1536 = vpop.f32.mrf.mxu0
    %v1537 = vadd.f32 %v1424, %v1536
    %1538 = vmatmul.f32.gmra.mxu0 %v1336
    %v1539 = vpop.f32.mrf.mxu0
    %v1540 = vadd.f32 %v1427, %v1539
    %1541 = vmatmul.f32.gmra.mxu0 %v1338
    %v1542 = vpop.f32.mrf.mxu0
    %v1543 = vadd.f32 %v1430, %v1542
    %1544 = vmatmul.f32.gmra.mxu0 %v1340
    %v1545 = vpop.f32.mrf.mxu0
    %v1546 = vadd.f32 %v1433, %v1545
    %1547 = vmatmul.f32.gmra.mxu0 %v1342
    %v1548 = vpop.f32.mrf.mxu0
    %v1549 = vadd.f32 %v1436, %v1548
    %1550 = vmatmul.f32.gmra.mxu0 %v1344
    %v1551 = vpop.f32.mrf.mxu0
    %v1552 = vadd.f32 %v1439, %v1551
    %1553 = vmatmul.f32.gmra.mxu0 %v1346
    %v1554 = vpop.f32.mrf.mxu0
    %v1555 = vadd.f32 %v1442, %v1554
    %1556 = vmatmul.f32.gmra.mxu0 %v1348
    %v1557 = vpop.f32.mrf.mxu0
    %v1558 = vadd.f32 %v1445, %v1557
    %1559 = vmatmul.f32.gmra.mxu0 %v1350
    %v1560 = vpop.f32.mrf.mxu0
    %v1561 = vadd.f32 %v1448, %v1560
    %1562 = vmatmul.f32.gmra.mxu0 %v1352
    %v1563 = vpop.f32.mrf.mxu0
    %v1564 = vadd.f32 %v1451, %v1563
    %1565 = vmatmul.f32.gmra.mxu0 %v1354
    %v1566 = vpop.f32.mrf.mxu0
    %v1567 = vadd.f32 %v1454, %v1566
    %1568 = vmatmul.f32.gmra.mxu0 %v1356
    %v1569 = vpop.f32.mrf.mxu0
    %v1570 = vadd.f32 %v1457, %v1569
    %1571 = vmatmul.f32.gmra.mxu0 %v1358
    %v1572 = vpop.f32.mrf.mxu0
    %v1573 = vadd.f32 %v1460, %v1572
    %1574 = vmatmul.f32.gmra.mxu0 %v1360
    %v1575 = vpop.f32.mrf.mxu0
    %v1576 = vadd.f32 %v1463, %v1575
    %1577 = vmatmul.f32.gmra.mxu0 %v1362
    %v1578 = vpop.f32.mrf.mxu0
    %v1579 = vadd.f32 %v1466, %v1578
    %1580 = vmatmul.f32.gmra.mxu0 %v1364
    %v1581 = vpop.f32.mrf.mxu0
    %v1582 = vadd.f32 %v1469, %v1581
    %1583 = vmatmul.f32.gmra.mxu0 %v1366
    %v1584 = vpop.f32.mrf.mxu0
    %v1585 = vadd.f32 %v1472, %v1584
    %1586 = vmatmul.f32.gmra.mxu0 %v1368
    %v1587 = vpop.f32.mrf.mxu0
    %v1588 = vadd.f32 %v1475, %v1587
    %1589 = vmatmul.f32.gmra.mxu0 %v1370
    %v1590 = vpop.f32.mrf.mxu0
    %v1591 = vadd.f32 %v1478, %v1590
    %1592 = vmatmul.f32.gmra.mxu0 %v1372
    %v1593 = vpop.f32.mrf.mxu0
    %v1594 = vadd.f32 %v1481, %v1593
    %1595 = vmatmul.f32.gmra.mxu0 %v1374
    %v1596 = vpop.f32.mrf.mxu0
    %v1597 = vadd.f32 %v1484, %v1596
    %1598 = vmatmul.f32.gmra.mxu0 %v1376
    %v1599 = vpop.f32.mrf.mxu0
    %v1600 = vadd.f32 %v1487, %v1599
    %1601 = vmatmul.f32.gmra.mxu0 %v1378
    %v1602 = vpop.f32.mrf.mxu0
    %v1603 = vadd.f32 %v1490, %v1602
    %1604 = vmatmul.f32.gmra.mxu0 %v1380
    %v1605 = vpop.f32.mrf.mxu0
    %v1606 = vadd.f32 %v1493, %v1605
    %1607 = vdwg.mxu0
    %v1608 = vld [vmem:[%s3] sm:$0xff]
    %v1609 = vld [vmem:[%s3 + $0x8] sm:$0xff]
    %v1610 = vadd.f32 %v1513, %v1608
    %v1611 = vadd.f32 %v1516, %v1609
    %v1612 = vadd.f32 %v1519, %v1608
    %v1613 = vadd.f32 %v1522, %v1609
    %v1614 = vadd.f32 %v1525, %v1608
    %v1615 = vadd.f32 %v1528, %v1609
    %v1616 = vadd.f32 %v1531, %v1608
    %v1617 = vadd.f32 %v1534, %v1609
    %v1618 = vadd.f32 %v1537, %v1608
    %v1619 = vadd.f32 %v1540, %v1609
    %v1620 = vadd.f32 %v1543, %v1608
    %v1621 = vadd.f32 %v1546, %v1609
    %v1622 = vadd.f32 %v1549, %v1608
    %v1623 = vadd.f32 %v1552, %v1609
    %v1624 = vadd.f32 %v1555, %v1608
    %v1625 = vadd.f32 %v1558, %v1609
    %v1626 = vadd.f32 %v1561, %v1608
    %v1627 = vadd.f32 %v1564, %v1609
    %v1628 = vadd.f32 %v1567, %v1608
    %v1629 = vadd.f32 %v1570, %v1609
    %v1630 = vadd.f32 %v1573, %v1608
    %v1631 = vadd.f32 %v1576, %v1609
    %v1632 = vadd.f32 %v1579, %v1608
    %v1633 = vadd.f32 %v1582, %v1609
    %v1634 = vadd.f32 %v1585, %v1608
    %v1635 = vadd.f32 %v1588, %v1609
    %v1636 = vadd.f32 %v1591, %v1608
    %v1637 = vadd.f32 %v1594, %v1609
    %v1638 = vadd.f32 %v1597, %v1608
    %v1639 = vadd.f32 %v1600, %v1609
    %v1640 = vadd.f32 %v1603, %v1608
    %v1641 = vadd.f32 %v1606, %v1609
    %v1642 = vmax.f32 %v1610, %v1611
    %v1643 = vrot.slane %v1642, 4
    %v1644 = vmax.f32 %v1642, %v1643
    %v1645 = vrot.slane %v1644, 2
    %v1646 = vmax.f32 %v1644, %v1645
    %v1647 = vrot.slane %v1646, 1
    %v1648 = vmax.f32 %v1646, %v1647
    %v1649 = vmax.f32 %v1612, %v1613
    %v1650 = vrot.slane %v1649, 4
    %v1651 = vmax.f32 %v1649, %v1650
    %v1652 = vrot.slane %v1651, 2
    %v1653 = vmax.f32 %v1651, %v1652
    %v1654 = vrot.slane %v1653, 1
    %v1655 = vmax.f32 %v1653, %v1654
    %v1656 = vmax.f32 %v1614, %v1615
    %v1657 = vrot.slane %v1656, 4
    %v1658 = vmax.f32 %v1656, %v1657
    %v1659 = vrot.slane %v1658, 2
    %v1660 = vmax.f32 %v1658, %v1659
    %v1661 = vrot.slane %v1660, 1
    %v1662 = vmax.f32 %v1660, %v1661
    %v1663 = vmax.f32 %v1616, %v1617
    %v1664 = vrot.slane %v1663, 4
    %v1665 = vmax.f32 %v1663, %v1664
    %v1666 = vrot.slane %v1665, 2
    %v1667 = vmax.f32 %v1665, %v1666
    %v1668 = vrot.slane %v1667, 1
    %v1669 = vmax.f32 %v1667, %v1668
    %v1670 = vmax.f32 %v1618, %v1619
    %v1671 = vrot.slane %v1670, 4
    %v1672 = vmax.f32 %v1670, %v1671
    %v1673 = vrot.slane %v1672, 2
    %v1674 = vmax.f32 %v1672, %v1673
    %v1675 = vrot.slane %v1674, 1
    %v1676 = vmax.f32 %v1674, %v1675
    %v1677 = vmax.f32 %v1620, %v1621
    %v1678 = vrot.slane %v1677, 4
    %v1679 = vmax.f32 %v1677, %v1678
    %v1680 = vrot.slane %v1679, 2
    %v1681 = vmax.f32 %v1679, %v1680
    %v1682 = vrot.slane %v1681, 1
    %v1683 = vmax.f32 %v1681, %v1682
    %v1684 = vmax.f32 %v1622, %v1623
    %v1685 = vrot.slane %v1684, 4
    %v1686 = vmax.f32 %v1684, %v1685
    %v1687 = vrot.slane %v1686, 2
    %v1688 = vmax.f32 %v1686, %v1687
    %v1689 = vrot.slane %v1688, 1
    %v1690 = vmax.f32 %v1688, %v1689
    %v1691 = vmax.f32 %v1624, %v1625
    %v1692 = vrot.slane %v1691, 4
    %v1693 = vmax.f32 %v1691, %v1692
    %v1694 = vrot.slane %v1693, 2
    %v1695 = vmax.f32 %v1693, %v1694
    %v1696 = vrot.slane %v1695, 1
    %v1697 = vmax.f32 %v1695, %v1696
    %v1698 = vmax.f32 %v1626, %v1627
    %v1699 = vrot.slane %v1698, 4
    %v1700 = vmax.f32 %v1698, %v1699
    %v1701 = vrot.slane %v1700, 2
    %v1702 = vmax.f32 %v1700, %v1701
    %v1703 = vrot.slane %v1702, 1
    %v1704 = vmax.f32 %v1702, %v1703
    %v1705 = vmax.f32 %v1628, %v1629
    %v1706 = vrot.slane %v1705, 4
    %v1707 = vmax.f32 %v1705, %v1706
    %v1708 = vrot.slane %v1707, 2
    %v1709 = vmax.f32 %v1707, %v1708
    %v1710 = vrot.slane %v1709, 1
    %v1711 = vmax.f32 %v1709, %v1710
    %v1712 = vmax.f32 %v1630, %v1631
    %v1713 = vrot.slane %v1712, 4
    %v1714 = vmax.f32 %v1712, %v1713
    %v1715 = vrot.slane %v1714, 2
    %v1716 = vmax.f32 %v1714, %v1715
    %v1717 = vrot.slane %v1716, 1
    %v1718 = vmax.f32 %v1716, %v1717
    %v1719 = vmax.f32 %v1632, %v1633
    %v1720 = vrot.slane %v1719, 4
    %v1721 = vmax.f32 %v1719, %v1720
    %v1722 = vrot.slane %v1721, 2
    %v1723 = vmax.f32 %v1721, %v1722
    %v1724 = vrot.slane %v1723, 1
    %v1725 = vmax.f32 %v1723, %v1724
    %v1726 = vmax.f32 %v1634, %v1635
    %v1727 = vrot.slane %v1726, 4
    %v1728 = vmax.f32 %v1726, %v1727
    %v1729 = vrot.slane %v1728, 2
    %v1730 = vmax.f32 %v1728, %v1729
    %v1731 = vrot.slane %v1730, 1
    %v1732 = vmax.f32 %v1730, %v1731
    %v1733 = vmax.f32 %v1636, %v1637
    %v1734 = vrot.slane %v1733, 4
    %v1735 = vmax.f32 %v1733, %v1734
    %v1736 = vrot.slane %v1735, 2
    %v1737 = vmax.f32 %v1735, %v1736
    %v1738 = vrot.slane %v1737, 1
    %v1739 = vmax.f32 %v1737, %v1738
    %v1740 = vmax.f32 %v1638, %v1639
    %v1741 = vrot.slane %v1740, 4
    %v1742 = vmax.f32 %v1740, %v1741
    %v1743 = vrot.slane %v1742, 2
    %v1744 = vmax.f32 %v1742, %v1743
    %v1745 = vrot.slane %v1744, 1
    %v1746 = vmax.f32 %v1744, %v1745
    %v1747 = vmax.f32 %v1640, %v1641
    %v1748 = vrot.slane %v1747, 4
    %v1749 = vmax.f32 %v1747, %v1748
    %v1750 = vrot.slane %v1749, 2
    %v1751 = vmax.f32 %v1749, %v1750
    %v1752 = vrot.slane %v1751, 1
    %v1753 = vmax.f32 %v1751, %v1752
    %v1754 = vld [vmem:[%s4] sm:$0xff]
    %v1755 = vld [vmem:[%s4 + $0x8] sm:$0xff]
    %v1756 = vld [vmem:[%s4 + $0x10] sm:$0xff]
    %v1757 = vld [vmem:[%s4 + $0x18] sm:$0xff]
    %v1758 = vld [vmem:[%s4 + $0x20] sm:$0xff]
    %v1759 = vld [vmem:[%s4 + $0x28] sm:$0xff]
    %v1760 = vld [vmem:[%s4 + $0x30] sm:$0xff]
    %v1761 = vld [vmem:[%s4 + $0x38] sm:$0xff]
    %v1762 = vld [vmem:[%s4 + $0x40] sm:$0xff]
    %v1763 = vld [vmem:[%s4 + $0x48] sm:$0xff]
    %v1764 = vld [vmem:[%s4 + $0x50] sm:$0xff]
    %v1765 = vld [vmem:[%s4 + $0x58] sm:$0xff]
    %v1766 = vld [vmem:[%s4 + $0x60] sm:$0xff]
    %v1767 = vld [vmem:[%s4 + $0x68] sm:$0xff]
    %v1768 = vld [vmem:[%s4 + $0x70] sm:$0xff]
    %v1769 = vld [vmem:[%s4 + $0x78] sm:$0xff]
    %v1770 = vld [vmem:[%s5] sm:$0x1]
    %v1772 = vperm.slane %v1770, 0
    %vm1790 = vcmask 1041409
    %v1791 = vsel %vm1790, %v1655, %v1648
    %vm1792 = vcmask 1042434
    %v1793 = vsel %vm1792, %v1662, %v1791
    %vm1794 = vcmask 1043459
    %v1795 = vsel %vm1794, %v1669, %v1793
    %vm1796 = vcmask 1044484
    %v1797 = vsel %vm1796, %v1676, %v1795
    %vm1798 = vcmask 1045509
    %v1799 = vsel %vm1798, %v1683, %v1797
    %vm1800 = vcmask 1046534
    %v1801 = vsel %vm1800, %v1690, %v1799
    %vm1802 = vcmask 1047559
    %v1803 = vsel %vm1802, %v1697, %v1801
    %v1804 = vsel %vm1790, %v1711, %v1704
    %v1805 = vsel %vm1792, %v1718, %v1804
    %v1806 = vsel %vm1794, %v1725, %v1805
    %v1807 = vsel %vm1796, %v1732, %v1806
    %v1808 = vsel %vm1798, %v1739, %v1807
    %v1809 = vsel %vm1800, %v1746, %v1808
    %v1810 = vsel %vm1802, %v1753, %v1809
    %1813 = vmatpush.msra.mxu0 %v1769
    %1814 = vmatpush.msra.mxu0 %v1768
    %1815 = vmatpush.msra.mxu0 %v1767
    %1816 = vmatpush.msra.mxu0 %v1766
    %1817 = vmatpush.msra.mxu0 %v1765
    %1818 = vmatpush.msra.mxu0 %v1764
    %1819 = vmatpush.msra.mxu0 %v1763
    %1820 = vmatpush.msra.mxu0 %v1762
    %1821 = vmatpush.msra.mxu0 %v1761
    %1822 = vmatpush.msra.mxu0 %v1760
    %1823 = vmatpush.msra.mxu0 %v1759
    %1824 = vmatpush.msra.mxu0 %v1758
    %1825 = vmatpush.msra.mxu0 %v1757
    %1826 = vmatpush.msra.mxu0 %v1756
    %1827 = vmatpush.msra.mxu0 %v1755
    %1828 = vmatpush.msra.mxu0 %v1754
    %1829 = vmatmul.f32.gmra.mxu0 %v1803
    %v1830 = vpop.f32.mrf.mxu0
    %v1831 = vadd.f32 %v1772, %v1830
    %1832 = vmatmul.f32.gmra.mxu0 %v1810
    %v1833 = vpop.f32.mrf.mxu0
    %v1834 = vadd.f32 %v1772, %v1833
    %1835 = vdwg.mxu0
    %1836 = vst [vmem:[#allocation2] sm:$0xff] %v1831
    %1837 = vst [vmem:[#allocation2 + $0x8] sm:$0xff] %v1834
    // Predicated region
    $region26: #{tpu_custom_call.1} parent=1 // pred_check
      _
    $region27: #{tpu_custom_call.1} parent=1 // pred_check_branch
      %1839 = sbr.rel (0) target = $region29
    $region28: #{tpu_custom_call.1} parent=1 // pred_region
      %1841 = vsyncadd [#allocation3], 0
      %s1842 = sshll.u32 [#allocation2], 4
      %s1843 = int_to_ptr.vmem [resolvable:$true] %s1842
      %s1844 = sshll.u32 %s6, 4
      %s1845 = int_to_ptr.hbm [resolvable:$true] %s1844
      %1850 = dma.vmem_to_hbm [thread:$0]  %s1843, 256, %s1845, [#allocation3], 128, 128, 8
    $region29: #{tpu_custom_call.1} parent=1 // pred_fallthru
      _
    // Predicated region
    $region30: #{tpu_custom_call.1} parent=1 // pred_check
      _
    $region31: #{tpu_custom_call.1} parent=1 // pred_check_branch
      %1852 = sbr.rel (0) target = $region33
    $region32: #{tpu_custom_call.1} parent=1 // pred_region
      %1854 = dma.done [#allocation3], 256
    $region33: #{tpu_custom_call.1} parent=1 // pred_fallthru
      _
    %1855 = vsyncpa [#allocation3], 1

</llo_original>
